<compile_context>
chip_gen: v7x
topology: tpu7x:2x2x1
jax: 0.10.0
libtpu: 0.0.40
codegen_flags: <defaults>
</compile_context>

<pallas_src>
import jax
import jax.numpy as jnp
from jax.experimental import pallas as pl
from jax.experimental.pallas import tpu as pltpu

HIDDEN = 256          # LSTM hidden size (fixed by the module: 256 * 4 gates)
FC1_UNITS = 128
FC2_UNITS = 128       # defined by the module but never used in forward
LANE = 128


def _round_up(x, m):
    return ((x + m - 1) // m) * m


# ---------------------------------------------------------------------------
# Deterministic parameter init (orthogonal weights, zero bias), mirroring
# layer_init(nn.Linear(...)) with w_scale=1.0.
# ---------------------------------------------------------------------------
def _orthogonal(key, shape, dtype=jnp.float32):
    """Matches nn.init.orthogonal_ semantics for a 2-D [out, in] weight."""
    rows, cols = shape
    n, m = max(rows, cols), min(rows, cols)
    a = jax.random.normal(key, (n, m), dtype=jnp.float32)
    q, r = jnp.linalg.qr(a)
    q = q * jnp.sign(jnp.diag(r))        # make the decomposition unique
    if rows < cols:
        q = q.T
    return q[:rows, :cols].astype(dtype)


def make_params(key, encoded_state_size, action_size):
    k1, k2, k3, k4 = jax.random.split(key, 4)
    # torch Linear weights are [out, in]; store transposed [in, out] for x @ W + b.
    w_x2h = _orthogonal(k1, (4 * HIDDEN, encoded_state_size)).T   # [E,   1024]
    w_h2h = _orthogonal(k2, (4 * HIDDEN, HIDDEN)).T               # [256, 1024]
    w_fc1 = _orthogonal(k3, (FC1_UNITS, HIDDEN)).T                # [256, 128]
    w_act = _orthogonal(k4, (action_size, FC1_UNITS)).T           # [128, A]

    # Lane-dense action head: zero-pad the output dim up to a multiple of 128.
    act_pad = max(_round_up(action_size, LANE), LANE)
    w_act_p = jnp.zeros((FC1_UNITS, act_pad), jnp.float32).at[:, :action_size].set(w_act)

    return dict(
        # x2h is hoisted out of the recurrence -> one big bf16 MXU matmul in wrapper.
        w_x2h=w_x2h.astype(jnp.bfloat16),                 # [E, 4H]
        # Recurrent h-path stays f32 (review correctness concern: hy drift).
        w_h2h=w_h2h.astype(jnp.float32),                  # [H, 4H]
        b_gates=jnp.zeros((1, 4 * HIDDEN), jnp.float32),  # b_x2h + b_h2h (both zero)
        w_fc1=w_fc1.astype(jnp.bfloat16),
        b_fc1=jnp.zeros((1, FC1_UNITS), jnp.float32),
        w_act=w_act_p.astype(jnp.bfloat16),
        b_act=jnp.zeros((1, act_pad), jnp.float32),
        action_size=action_size,
    )


# ---------------------------------------------------------------------------
# Rollout kernel.  grid = (batch_tiles, T).  Per grid point:
#   gates = xg[t] (streamed, precomputed x2h) + hy_prev @ w_h2h + b
#   LSTM elementwise cell update in f32, fc1+relu, padded action head.
# Recurrent state lives in VMEM scratch across the T axis ("arbitrary").
# ---------------------------------------------------------------------------
def ddqn_rollout_kernel(xg_ref, hx0_ref, cx0_ref,
                        wh_ref, bg_ref, wf_ref, bf_ref, wa_ref, ba_ref,
                        act_ref, hy_ref, cy_ref,
                        h_sc, c_sc):
    t = pl.program_id(1)

    @pl.when(t == 0)
    def _():                               # load initial state for this batch tile
        h_sc[...] = hx0_ref[...]
        c_sc[...] = cx0_ref[...]

    hx = h_sc[...]                         # f32 [bb, H]
    cx = c_sc[...]                         # f32 [bb, H]

    # gates = x2h(x_t) (precomputed, streamed) + h2h(h_{t-1}) + bias   (f32 h-path)
    gates = (xg_ref[0]
             + jnp.dot(hx, wh_ref[...], preferred_element_type=jnp.float32)
             + bg_ref[...])

    H = HIDDEN                             # gate slices are 128-aligned (256 wide)
    ingate     = jax.nn.sigmoid(gates[:, 0 * H:1 * H])
    forgetgate = jax.nn.sigmoid(gates[:, 1 * H:2 * H])
    cellgate   = jnp.tanh(gates[:, 2 * H:3 * H])
    outgate    = jax.nn.sigmoid(gates[:, 3 * H:4 * H])

    # LSTM cell update kept fully in f32 (recurrent state precision).
    cy = cx * forgetgate + ingate * cellgate
    hy = outgate * jnp.tanh(cy)

    h_sc[...] = hy
    c_sc[...] = cy
    hy_ref[...] = hy                       # last timestep's write survives
    cy_ref[...] = cy

    # Non-recurrent head: bf16 MXU operands, f32 accumulation.
    h1 = jnp.maximum(
        jnp.dot(hy.astype(jnp.bfloat16), wf_ref[...],
                preferred_element_type=jnp.float32) + bf_ref[...],
        0.0)
    # Lane-dense (padded to 128) output store for this timestep.
    act_ref[0] = jnp.dot(h1.astype(jnp.bfloat16), wa_ref[...],
                         preferred_element_type=jnp.float32) + ba_ref[...]


def ddqn_rollout(params, encoded_states, hx, cx, *, batch_block=None):
    """Applies the module's forward() for t = 0..T-1 in a single pallas_call.

    encoded_states: [T, B, E];  hx, cx: [B, H].
    Returns (action_values [T, B, A], hy [B, H], cy [B, H]).
    """
    T, B, E = encoded_states.shape
    H = HIDDEN
    action_size = params["action_size"]
    act_pad = params["w_act"].shape[1]

    bb = B if batch_block is None else batch_block
    assert B % bb == 0 and bb % 8 == 0, "batch tile must divide B and be a multiple of 8"
    nb = B // bb

    # Hoist x2h out of the recurrence: one large [T*B, E] @ [E, 4H] bf16 matmul
    # (near-full MXU rows) instead of T tiny matmuls on the serial critical path.
    xg = jnp.dot(encoded_states.reshape(T * B, E).astype(jnp.bfloat16),
                 params["w_x2h"], preferred_element_type=jnp.float32)
    xg = xg.reshape(T, B, 4 * H)

    def _nbytes(a):
        return int(a.size) * a.dtype.itemsize

    flops = 2 * T * B * (H * 4 * H + H * FC1_UNITS + FC1_UNITS * act_pad)
    transcendentals = 9 * T * B * H        # 3 sigmoids (~exp+recip) + 2 tanh per step
    bytes_accessed = (_nbytes(xg) + _nbytes(hx) + _nbytes(cx)
                      + sum(_nbytes(params[k]) for k in
                            ("w_h2h", "b_gates", "w_fc1", "b_fc1", "w_act", "b_act"))
                      + 4 * (T * B * act_pad + 2 * B * H))

    # Weights/biases: constant block index across the whole grid -> DMA'd once,
    # VMEM-resident for the entire rollout.
    def weight_spec(shape):
        return pl.BlockSpec(shape, lambda bi, t: (0, 0))

    actions_pad, hy, cy = pl.pallas_call(
        ddqn_rollout_kernel,
        out_shape=(jax.ShapeDtypeStruct((T, B, act_pad), jnp.float32),
                   jax.ShapeDtypeStruct((B, H), jnp.float32),
                   jax.ShapeDtypeStruct((B, H), jnp.float32)),
        grid=(nb, T),
        in_specs=[
            pl.BlockSpec((1, bb, 4 * H), lambda bi, t: (t, bi, 0)),   # streamed x-gates
            pl.BlockSpec((bb, H), lambda bi, t: (bi, 0)),             # hx0
            pl.BlockSpec((bb, H), lambda bi, t: (bi, 0)),             # cx0
            weight_spec((H, 4 * H)),                                  # w_h2h (f32)
            weight_spec((1, 4 * H)),                                  # b_gates
            weight_spec((H, FC1_UNITS)),                              # w_fc1 (bf16)
            weight_spec((1, FC1_UNITS)),                              # b_fc1
            weight_spec((FC1_UNITS, act_pad)),                        # w_act (bf16)
            weight_spec((1, act_pad)),                                # b_act
        ],
        out_specs=(
            pl.BlockSpec((1, bb, act_pad), lambda bi, t: (t, bi, 0)),
            pl.BlockSpec((bb, H), lambda bi, t: (bi, 0)),
            pl.BlockSpec((bb, H), lambda bi, t: (bi, 0)),
        ),
        scratch_shapes=[pltpu.VMEM((bb, H), jnp.float32),   # hy carry
                        pltpu.VMEM((bb, H), jnp.float32)],  # cy carry
        compiler_params=pltpu.CompilerParams(
            dimension_semantics=("parallel", "arbitrary")),
        cost_estimate=pl.CostEstimate(flops=flops,
                                      transcendentals=transcendentals,
                                      bytes_accessed=bytes_accessed),
    )(xg, hx, cx,
      params["w_h2h"], params["b_gates"],
      params["w_fc1"], params["b_fc1"],
      params["w_act"], params["b_act"])

    return actions_pad[..., :action_size], hy, cy


def ddqn_forward(params, encoded_state, hx, cx):
    """Single-step forward with exactly the module's signature/semantics (T=1)."""
    actions_seq, hy, cy = ddqn_rollout(params, encoded_state[None], hx, cx)
    return actions_seq[0], hy, cy


# ---------------------------------------------------------------------------
# Pure-JAX per-step reference (f32 math on the stored weights) for correctness.
# ---------------------------------------------------------------------------
def ddqn_step_ref(params, x, hx, cx):
    wx = params["w_x2h"].astype(jnp.float32)
    wh = params["w_h2h"].astype(jnp.float32)
    wf = params["w_fc1"].astype(jnp.float32)
    wa = params["w_act"].astype(jnp.float32)
    gates = x @ wx + hx @ wh + params["b_gates"]
    i, f, g, o = jnp.split(gates, 4, axis=1)          # [i, f, g, o] = chunk(4, 1)
    i, f, g, o = jax.nn.sigmoid(i), jax.nn.sigmoid(f), jnp.tanh(g), jax.nn.sigmoid(o)
    cy = cx * f + i * g
    hy = o * jnp.tanh(cy)
    h1 = jax.nn.relu(hy @ wf + params["b_fc1"])
    actions = h1 @ wa + params["b_act"]
    return actions[:, :params["action_size"]], hy, cy


if __name__ == "__main__":
    B, T = 16, 8                # batch multiple of 16 (bf16 sublane tile), short rollout
    ENCODED_STATE_SIZE = 128    # encoded_state feature size
    ACTION_SIZE = 12            # Super Mario Bros action space size

    key = jax.random.PRNGKey(0)
    kp, kx, kh, kc = jax.random.split(key, 4)

    params = make_params(kp, ENCODED_STATE_SIZE, ACTION_SIZE)
    xs = jax.random.normal(kx, (T, B, ENCODED_STATE_SIZE), jnp.float32)
    hx = jax.random.normal(kh, (B, HIDDEN), jnp.float32)
    cx = jax.random.normal(kc, (B, HIDDEN), jnp.float32)

    # Reference rollout (pure JAX, per-step, f32).
    ref_actions = []
    h_ref, c_ref = hx, cx
    for t in range(T):
        a_t, h_ref, c_ref = ddqn_step_ref(params, xs[t], h_ref, c_ref)
        ref_actions.append(a_t)
    ref_actions = jnp.stack(ref_actions)

    # Fused rollout kernel; batch_block=8 exercises the ("parallel") batch-tile axis.
    actions_seq, hy, cy = ddqn_rollout(params, xs, hx, cx, batch_block=8)
    jax.block_until_ready((actions_seq, hy, cy))

    assert actions_seq.shape == (T, B, ACTION_SIZE)
    # bf16 MXU operand casts (x2h / fc1 / action head) -> loosened tolerances.
    assert jnp.allclose(actions_seq, ref_actions, atol=2e-2, rtol=2e-2)
    assert jnp.allclose(hy, h_ref, atol=2e-2, rtol=2e-2)
    assert jnp.allclose(cy, c_ref, atol=2e-2, rtol=2e-2)

    # Single-step forward (the module's exact signature) via the same kernel, T=1.
    a1, h1, c1 = ddqn_forward(params, xs[0], hx, cx)
    jax.block_until_ready((a1, h1, c1))
    a1_ref, h1_ref, c1_ref = ddqn_step_ref(params, xs[0], hx, cx)
    assert a1.shape == (B, ACTION_SIZE)
    assert jnp.allclose(a1, a1_ref, atol=2e-2, rtol=2e-2)
    assert jnp.allclose(h1, h1_ref, atol=2e-2, rtol=2e-2)
    assert jnp.allclose(c1, c1_ref, atol=2e-2, rtol=2e-2)

    print("KERNEL_OK")
</pallas_src>

<mosaic_0001>
module attributes {stable_mosaic.version = 11 : i64} {
  func.func @ddqn_rollout_kernel(%arg0: i32, %arg1: i32, %arg2: memref<1x8x1024xf32, #tpu.memory_space<vmem>>, %arg3: memref<8x256xf32, #tpu.memory_space<vmem>>, %arg4: memref<8x256xf32, #tpu.memory_space<vmem>>, %arg5: memref<256x1024xf32, #tpu.memory_space<vmem>>, %arg6: memref<1x1024xf32, #tpu.memory_space<vmem>>, %arg7: memref<256x128xbf16, #tpu.memory_space<vmem>>, %arg8: memref<1x128xf32, #tpu.memory_space<vmem>>, %arg9: memref<128x128xbf16, #tpu.memory_space<vmem>>, %arg10: memref<1x128xf32, #tpu.memory_space<vmem>>, %arg11: memref<1x8x128xf32, #tpu.memory_space<vmem>>, %arg12: memref<8x256xf32, #tpu.memory_space<vmem>>, %arg13: memref<8x256xf32, #tpu.memory_space<vmem>>, %arg14: memref<8x256xf32, #tpu.memory_space<vmem>>, %arg15: memref<8x256xf32, #tpu.memory_space<vmem>>) attributes {dimension_semantics = [#tpu.dimension_semantics<parallel>, #tpu.dimension_semantics<arbitrary>], iteration_bounds = array<i64: 2, 8>, scalar_prefetch = 0 : i64, scratch_operands = 2 : i64, tpu.core_type = #tpu.core_type<tc>, window_params = [{transform_indices = @transform_0, window_bounds = array<i64: 1, 8, 1024>}, {transform_indices = @transform_1, window_bounds = array<i64: 8, 256>}, {transform_indices = @transform_2, window_bounds = array<i64: 8, 256>}, {pipeline_mode = #tpu.pipeline_mode<synchronous>, transform_indices = @transform_3, window_bounds = array<i64: 256, 1024>}, {pipeline_mode = #tpu.pipeline_mode<synchronous>, transform_indices = @transform_4, window_bounds = array<i64: 1, 1024>}, {pipeline_mode = #tpu.pipeline_mode<synchronous>, transform_indices = @transform_5, window_bounds = array<i64: 256, 128>}, {pipeline_mode = #tpu.pipeline_mode<synchronous>, transform_indices = @transform_6, window_bounds = array<i64: 1, 128>}, {pipeline_mode = #tpu.pipeline_mode<synchronous>, transform_indices = @transform_7, window_bounds = array<i64: 128, 128>}, {pipeline_mode = #tpu.pipeline_mode<synchronous>, transform_indices = @transform_8, window_bounds = array<i64: 1, 128>}, {transform_indices = @transform_9, window_bounds = array<i64: 1, 8, 128>}, {transform_indices = @transform_10, window_bounds = array<i64: 8, 256>}, {transform_indices = @transform_11, window_bounds = array<i64: 8, 256>}]} {
    %c0_i32 = arith.constant 0 : i32
    %0 = arith.cmpi eq, %arg1, %c0_i32 : i32
    %1 = arith.extui %0 : i1 to i32
    %c0_i32_0 = arith.constant 0 : i32
    %2 = arith.cmpi ne, %1, %c0_i32_0 : i32
    scf.if %2 {
      %c0_36 = arith.constant 0 : index
      %c0_37 = arith.constant 0 : index
      %59 = vector.load %arg3[%c0_36, %c0_37] : memref<8x256xf32, #tpu.memory_space<vmem>>, vector<8x256xf32>
      %c0_38 = arith.constant 0 : index
      %c0_39 = arith.constant 0 : index
      %60 = vector.load %arg14[%c0_38, %c0_39] : memref<8x256xf32, #tpu.memory_space<vmem>>, vector<8x256xf32>
      tpu.vector_store %arg14[%c0_38, %c0_39], %59 {strides = array<i32>} : memref<8x256xf32, #tpu.memory_space<vmem>>, vector<8x256xf32>,
      %c0_40 = arith.constant 0 : index
      %c0_41 = arith.constant 0 : index
      %61 = vector.load %arg4[%c0_40, %c0_41] : memref<8x256xf32, #tpu.memory_space<vmem>>, vector<8x256xf32>
      %c0_42 = arith.constant 0 : index
      %c0_43 = arith.constant 0 : index
      %62 = vector.load %arg15[%c0_42, %c0_43] : memref<8x256xf32, #tpu.memory_space<vmem>>, vector<8x256xf32>
      tpu.vector_store %arg15[%c0_42, %c0_43], %61 {strides = array<i32>} : memref<8x256xf32, #tpu.memory_space<vmem>>, vector<8x256xf32>,
    } else {
    }
    %c0 = arith.constant 0 : index
    %c0_1 = arith.constant 0 : index
    %3 = vector.load %arg14[%c0, %c0_1] : memref<8x256xf32, #tpu.memory_space<vmem>>, vector<8x256xf32>
    %c0_2 = arith.constant 0 : index
    %c0_3 = arith.constant 0 : index
    %4 = vector.load %arg15[%c0_2, %c0_3] : memref<8x256xf32, #tpu.memory_space<vmem>>, vector<8x256xf32>
    %c0_4 = arith.constant 0 : index
    %c0_5 = arith.constant 0 : index
    %c0_6 = arith.constant 0 : index
    %5 = vector.load %arg2[%c0_4, %c0_5, %c0_6] : memref<1x8x1024xf32, #tpu.memory_space<vmem>>, vector<1x8x1024xf32>
    %6 = vector.shape_cast %5 : vector<1x8x1024xf32> to vector<8x1024xf32>
    %c0_7 = arith.constant 0 : index
    %c0_8 = arith.constant 0 : index
    %7 = vector.load %arg5[%c0_7, %c0_8] : memref<256x1024xf32, #tpu.memory_space<vmem>>, vector<256x1024xf32>
    %cst = arith.constant dense<0.000000e+00> : vector<8x1024xf32>
    %8 = tpu.matmul %3, %7, %cst {dimension_numbers = #tpu.dot_dimension_numbers<[1], [0], [0], [1], [0, 0, 1, 1], [], []>} : vector<8x256xf32>, vector<256x1024xf32>, vector<8x1024xf32> -> vector<8x1024xf32>
    %9 = arith.addf %6, %8 : vector<8x1024xf32>
    %c0_9 = arith.constant 0 : index
    %c0_10 = arith.constant 0 : index
    %10 = vector.load %arg6[%c0_9, %c0_10] : memref<1x1024xf32, #tpu.memory_space<vmem>>, vector<1x1024xf32>
    %11 = vector.broadcast %10 : vector<1x1024xf32> to vector<8x1024xf32>
    %12 = arith.addf %9, %11 : vector<8x1024xf32>
    %13 = vector.extract_strided_slice %12 {offsets = [0, 0], sizes = [8, 256], strides = [1, 1]} : vector<8x1024xf32> to vector<8x256xf32>
    %14 = arith.negf %13 : vector<8x256xf32>
    %15 = math.exp %14 : vector<8x256xf32>
    %cst_11 = arith.constant 1.000000e+00 : f32
    %16 = vector.broadcast %cst_11 : f32 to vector<8x256xf32>
    %17 = arith.addf %16, %15 : vector<8x256xf32>
    %18 = arith.divf %16, %17 : vector<8x256xf32>
    %19 = vector.extract_strided_slice %12 {offsets = [0, 256], sizes = [8, 256], strides = [1, 1]} : vector<8x1024xf32> to vector<8x256xf32>
    %20 = arith.negf %19 : vector<8x256xf32>
    %21 = math.exp %20 : vector<8x256xf32>
    %cst_12 = arith.constant 1.000000e+00 : f32
    %22 = vector.broadcast %cst_12 : f32 to vector<8x256xf32>
    %23 = arith.addf %22, %21 : vector<8x256xf32>
    %24 = arith.divf %22, %23 : vector<8x256xf32>
    %25 = vector.extract_strided_slice %12 {offsets = [0, 512], sizes = [8, 256], strides = [1, 1]} : vector<8x1024xf32> to vector<8x256xf32>
    %26 = math.tanh %25 : vector<8x256xf32>
    %27 = vector.extract_strided_slice %12 {offsets = [0, 768], sizes = [8, 256], strides = [1, 1]} : vector<8x1024xf32> to vector<8x256xf32>
    %28 = arith.negf %27 : vector<8x256xf32>
    %29 = math.exp %28 : vector<8x256xf32>
    %cst_13 = arith.constant 1.000000e+00 : f32
    %30 = vector.broadcast %cst_13 : f32 to vector<8x256xf32>
    %31 = arith.addf %30, %29 : vector<8x256xf32>
    %32 = arith.divf %30, %31 : vector<8x256xf32>
    %33 = arith.mulf %4, %24 : vector<8x256xf32>
    %34 = arith.mulf %18, %26 : vector<8x256xf32>
    %35 = arith.addf %33, %34 : vector<8x256xf32>
    %36 = math.tanh %35 : vector<8x256xf32>
    %37 = arith.mulf %32, %36 : vector<8x256xf32>
    %c0_14 = arith.constant 0 : index
    %c0_15 = arith.constant 0 : index
    %38 = vector.load %arg14[%c0_14, %c0_15] : memref<8x256xf32, #tpu.memory_space<vmem>>, vector<8x256xf32>
    tpu.vector_store %arg14[%c0_14, %c0_15], %37 {strides = array<i32>} : memref<8x256xf32, #tpu.memory_space<vmem>>, vector<8x256xf32>,
    %c0_16 = arith.constant 0 : index
    %c0_17 = arith.constant 0 : index
    %39 = vector.load %arg15[%c0_16, %c0_17] : memref<8x256xf32, #tpu.memory_space<vmem>>, vector<8x256xf32>
    tpu.vector_store %arg15[%c0_16, %c0_17], %35 {strides = array<i32>} : memref<8x256xf32, #tpu.memory_space<vmem>>, vector<8x256xf32>,
    %c0_18 = arith.constant 0 : index
    %c0_19 = arith.constant 0 : index
    %40 = vector.load %arg12[%c0_18, %c0_19] : memref<8x256xf32, #tpu.memory_space<vmem>>, vector<8x256xf32>
    tpu.vector_store %arg12[%c0_18, %c0_19], %37 {strides = array<i32>} : memref<8x256xf32, #tpu.memory_space<vmem>>, vector<8x256xf32>,
    %c0_20 = arith.constant 0 : index
    %c0_21 = arith.constant 0 : index
    %41 = vector.load %arg13[%c0_20, %c0_21] : memref<8x256xf32, #tpu.memory_space<vmem>>, vector<8x256xf32>
    tpu.vector_store %arg13[%c0_20, %c0_21], %35 {strides = array<i32>} : memref<8x256xf32, #tpu.memory_space<vmem>>, vector<8x256xf32>,
    %42 = arith.truncf %37 : vector<8x256xf32> to vector<8x256xbf16>
    %c0_22 = arith.constant 0 : index
    %c0_23 = arith.constant 0 : index
    %43 = vector.load %arg7[%c0_22, %c0_23] : memref<256x128xbf16, #tpu.memory_space<vmem>>, vector<256x128xbf16>
    %cst_24 = arith.constant dense<0.000000e+00> : vector<8x128xf32>
    %44 = tpu.matmul %42, %43, %cst_24 {dimension_numbers = #tpu.dot_dimension_numbers<[1], [0], [0], [1], [0, 0, 1, 1], [], []>} : vector<8x256xbf16>, vector<256x128xbf16>, vector<8x128xf32> -> vector<8x128xf32>
    %c0_25 = arith.constant 0 : index
    %c0_26 = arith.constant 0 : index
    %45 = vector.load %arg8[%c0_25, %c0_26] : memref<1x128xf32, #tpu.memory_space<vmem>>, vector<1x128xf32>
    %46 = vector.broadcast %45 : vector<1x128xf32> to vector<8x128xf32>
    %47 = arith.addf %44, %46 : vector<8x128xf32>
    %cst_27 = arith.constant 0.000000e+00 : f32
    %48 = vector.broadcast %cst_27 : f32 to vector<8x128xf32>
    %49 = arith.maximumf %47, %48 : vector<8x128xf32>
    %50 = arith.truncf %49 : vector<8x128xf32> to vector<8x128xbf16>
    %c0_28 = arith.constant 0 : index
    %c0_29 = arith.constant 0 : index
    %51 = vector.load %arg9[%c0_28, %c0_29] : memref<128x128xbf16, #tpu.memory_space<vmem>>, vector<128x128xbf16>
    %cst_30 = arith.constant dense<0.000000e+00> : vector<8x128xf32>
    %52 = tpu.matmul %50, %51, %cst_30 {dimension_numbers = #tpu.dot_dimension_numbers<[1], [0], [0], [1], [0, 0, 1, 1], [], []>} : vector<8x128xbf16>, vector<128x128xbf16>, vector<8x128xf32> -> vector<8x128xf32>
    %c0_31 = arith.constant 0 : index
    %c0_32 = arith.constant 0 : index
    %53 = vector.load %arg10[%c0_31, %c0_32] : memref<1x128xf32, #tpu.memory_space<vmem>>, vector<1x128xf32>
    %54 = vector.broadcast %53 : vector<1x128xf32> to vector<8x128xf32>
    %55 = arith.addf %52, %54 : vector<8x128xf32>
    %c0_33 = arith.constant 0 : index
    %c0_34 = arith.constant 0 : index
    %c0_35 = arith.constant 0 : index
    %56 = vector.load %arg11[%c0_33, %c0_34, %c0_35] : memref<1x8x128xf32, #tpu.memory_space<vmem>>, vector<1x8x128xf32>
    %57 = vector.shape_cast %56 : vector<1x8x128xf32> to vector<8x128xf32>
    %58 = vector.shape_cast %55 : vector<8x128xf32> to vector<1x8x128xf32>
    tpu.vector_store %arg11[%c0_33, %c0_34, %c0_35], %58 {strides = array<i32>} : memref<1x8x128xf32, #tpu.memory_space<vmem>>, vector<1x8x128xf32>,
    return
  }
  func.func @transform_0(%arg0: i32, %arg1: i32) -> (i32, i32, i32) {
    %c0_i32 = arith.constant 0 : i32
    %c0_i32_0 = arith.constant 0 : i32
    return %arg1, %arg0, %c0_i32 : i32, i32, i32
  }
  func.func @transform_1(%arg0: i32, %arg1: i32) -> (i32, i32) {
    %c0_i32 = arith.constant 0 : i32
    %c0_i32_0 = arith.constant 0 : i32
    return %arg0, %c0_i32 : i32, i32
  }
  func.func @transform_2(%arg0: i32, %arg1: i32) -> (i32, i32) {
    %c0_i32 = arith.constant 0 : i32
    %c0_i32_0 = arith.constant 0 : i32
    return %arg0, %c0_i32 : i32, i32
  }
  func.func @transform_3(%arg0: i32, %arg1: i32) -> (i32, i32) {
    %c0_i32 = arith.constant 0 : i32
    %c0_i32_0 = arith.constant 0 : i32
    %c0_i32_1 = arith.constant 0 : i32
    return %c0_i32, %c0_i32_0 : i32, i32
  }
  func.func @transform_4(%arg0: i32, %arg1: i32) -> (i32, i32) {
    %c0_i32 = arith.constant 0 : i32
    %c0_i32_0 = arith.constant 0 : i32
    %c0_i32_1 = arith.constant 0 : i32
    return %c0_i32, %c0_i32_0 : i32, i32
  }
  func.func @transform_5(%arg0: i32, %arg1: i32) -> (i32, i32) {
    %c0_i32 = arith.constant 0 : i32
    %c0_i32_0 = arith.constant 0 : i32
    %c0_i32_1 = arith.constant 0 : i32
    return %c0_i32, %c0_i32_0 : i32, i32
  }
  func.func @transform_6(%arg0: i32, %arg1: i32) -> (i32, i32) {
    %c0_i32 = arith.constant 0 : i32
    %c0_i32_0 = arith.constant 0 : i32
    %c0_i32_1 = arith.constant 0 : i32
    return %c0_i32, %c0_i32_0 : i32, i32
  }
  func.func @transform_7(%arg0: i32, %arg1: i32) -> (i32, i32) {
    %c0_i32 = arith.constant 0 : i32
    %c0_i32_0 = arith.constant 0 : i32
    %c0_i32_1 = arith.constant 0 : i32
    return %c0_i32, %c0_i32_0 : i32, i32
  }
  func.func @transform_8(%arg0: i32, %arg1: i32) -> (i32, i32) {
    %c0_i32 = arith.constant 0 : i32
    %c0_i32_0 = arith.constant 0 : i32
    %c0_i32_1 = arith.constant 0 : i32
    return %c0_i32, %c0_i32_0 : i32, i32
  }
  func.func @transform_9(%arg0: i32, %arg1: i32) -> (i32, i32, i32) {
    %c0_i32 = arith.constant 0 : i32
    %c0_i32_0 = arith.constant 0 : i32
    return %arg1, %arg0, %c0_i32 : i32, i32, i32
  }
  func.func @transform_10(%arg0: i32, %arg1: i32) -> (i32, i32) {
    %c0_i32 = arith.constant 0 : i32
    %c0_i32_0 = arith.constant 0 : i32
    return %arg0, %c0_i32 : i32, i32
  }
  func.func @transform_11(%arg0: i32, %arg1: i32) -> (i32, i32) {
    %c0_i32 = arith.constant 0 : i32
    %c0_i32_0 = arith.constant 0 : i32
    return %arg0, %c0_i32 : i32, i32
  }
}

</mosaic_0001>

<llo_original>
// kernel: tpu_custom_call.1
$region0: #{tpu_custom_call.1}
  #allocation0 [shape = 'u32[]', space=smem, size = 0x4, offset = 0x4, fixed_abs, tag = 'smem constant byte address 0x4 - core index']
  #allocation1 [shape = 'u32[144,128]{1,0:T(1,128)}', space=vmem, size = 0x12000, scoped, tag = 'internal scratch']
  #allocation2 [shape = 'f32[8,256]{1,0:T(8,128)}', space=vmem, size = 0x2000, scoped, tag = 'scratch operand']
  #allocation3 [shape = 'f32[8,256]{1,0:T(8,128)}', space=vmem, size = 0x2000, scoped, tag = 'scratch operand']
  %s0 = inlined_call_operand.hbm [shape: f32[8,16,1024], index: 0, kind: input, shape index: {}]
  %s1 = inlined_call_operand.hbm [shape: f32[16,256], index: 1, kind: input, shape index: {}]
  %s2 = inlined_call_operand.hbm [shape: f32[16,256], index: 2, kind: input, shape index: {}]
  %s3 = inlined_call_operand.hbm [shape: f32[256,1024], index: 3, kind: input, shape index: {}]
  %s4 = inlined_call_operand.vmem [shape: f32[1,1024], index: 4, kind: input, shape index: {}]
  %s5 = inlined_call_operand.hbm [shape: bf16[256,128], index: 5, kind: input, shape index: {}]
  %s6 = inlined_call_operand.vmem [shape: f32[1,128], index: 6, kind: input, shape index: {}]
  %s7 = inlined_call_operand.hbm [shape: bf16[128,128], index: 7, kind: input, shape index: {}]
  %s8 = inlined_call_operand.vmem [shape: f32[1,128], index: 8, kind: input, shape index: {}]
  %s9 = inlined_call_operand.hbm [shape: f32[8,16,128], index: 9, kind: output, shape index: {0}]
  %s10 = inlined_call_operand.hbm [shape: f32[16,256], index: 10, kind: output, shape index: {1}]
  %s11 = inlined_call_operand.hbm [shape: f32[16,256], index: 11, kind: output, shape index: {2}]
  %12 = xla_tuple %s9, %s10, %s11
  %s13 = sld [smem:[#allocation0]]
  $region113: #{tpu_custom_call.1} parent=0
    _
  %s15 = ssub.s32 1, %s13
  %s16 = scalar_select 0, %s15, %s13
  $region1: #{tpu_custom_call.1} parent=0
    #allocation4 [shape = 'u8[65536]{0}', space=vmem, size = 0x10000, scoped, tag = 'input window, operand 0']
    #allocation5 [shape = 's32[2]{0}', space=sflag, size = 0x8, scoped, tag = 'scoped memory for tpu_custom_call.1']
    #allocation6 [shape = 's32[2]{0}', space=sflag, size = 0x8, scoped, tag = 'scoped memory for tpu_custom_call.1']
    #allocation7 [shape = 'u8[16384]{0}', space=vmem, size = 0x4000, scoped, tag = 'input window, operand 1']
    #allocation8 [shape = 's32[2]{0}', space=sflag, size = 0x8, scoped, tag = 'scoped memory for tpu_custom_call.1']
    #allocation9 [shape = 'u8[16384]{0}', space=vmem, size = 0x4000, scoped, tag = 'input window, operand 2']
    #allocation10 [shape = 'u8[1048576]{0}', space=vmem, size = 0x100000, scoped, tag = 'input window, operand 3, single buffered']
    #allocation11 [shape = 's32[1]{0}', space=sflag, size = 0x4, scoped, tag = 'scoped memory for tpu_custom_call.1']
    #allocation12 [shape = 'u8[65536]{0}', space=vmem, size = 0x10000, scoped, tag = 'input window, operand 5, single buffered']
    #allocation13 [shape = 'u8[32768]{0}', space=vmem, size = 0x8000, scoped, tag = 'input window, operand 7, single buffered']
    #allocation14 [shape = 's32[1]{0}', space=sflag, size = 0x4, scoped, tag = 'scoped memory for tpu_custom_call.1']
    #allocation15 [shape = 'u8[8192]{0}', space=vmem, size = 0x2000, scoped, tag = 'output window, operand 0']
    #allocation16 [shape = 'u8[16384]{0}', space=vmem, size = 0x4000, scoped, tag = 'output window, operand 1']
    #allocation17 [shape = 's32[2]{0}', space=sflag, size = 0x8, scoped, tag = 'scoped memory for tpu_custom_call.1']
    #allocation18 [shape = 'u8[16384]{0}', space=vmem, size = 0x4000, scoped, tag = 'output window, operand 2']
    %17 = vsyncpa [#allocation5], 0
    %s18 = scalar_lea.sflag [#allocation5], 1
    %19 = vsyncpa %s18, 0
    %20 = vsyncpa [#allocation8], 0
    %s21 = scalar_lea.sflag [#allocation8], 1
    %22 = vsyncpa %s21, 0
    %23 = vsyncpa [#allocation11], 0
    %24 = vsyncpa [#allocation14], 0
    %25 = vsyncpa [#allocation6], 0
    %s26 = scalar_lea.sflag [#allocation6], 1
    %27 = vsyncpa %s26, 0
    %28 = vsyncpa [#allocation17], 0
    %s29 = scalar_lea.sflag [#allocation17], 1
    %30 = vsyncpa %s29, 0
    loop: start=0, step=1, limit=18
    $region2: #{tpu_custom_call.1} parent=1 // loop_pre_header
      _
    $region3: #{tpu_custom_call.1} parent=1 // loop_header
      %s32 = sphi 0, %s36
      %p33 = scmp.ge.s32.totalorder %s32, 18
      %s39 = sphi 0, %s51
      %s40 = sphi 0, %s47
      %s41 = sphi 0, %s39
      %s42 = sphi 0, %s40
      %s43 = sphi 0, %s41
      %s44 = sphi 0, %s42
      %s56 = sphi 0, %s58
      %s59 = sphi 0, %s56
      %s60 = sphi 0, %s59
      %s76 = sphi 0, %s60
      %s82 = sphi 0, %s84
      %s85 = sphi 0, %s82
      %s86 = sphi 0, %s85
      %s102 = sphi 0, %s86
      %s108 = sphi 0, %s110
      %s111 = sphi 0, %s108
      %s112 = sphi 0, %s111
      %s128 = sphi 0, %s112
      %s132 = sphi 0, %s132
      %s134 = sphi 0, %s132
      %s135 = sphi 0, %s134
      %s149 = sphi 0, %s135
      %s153 = sphi 0, %s153
      %s155 = sphi 0, %s153
      %s156 = sphi 0, %s155
      %s170 = sphi 0, %s156
      %s174 = sphi 0, %s174
      %s176 = sphi 0, %s174
      %s177 = sphi 0, %s176
      %s191 = sphi 0, %s177
      %s195 = sphi 0, %s195
      %s197 = sphi 0, %s195
      %s198 = sphi 0, %s197
      %s212 = sphi 0, %s198
      %s216 = sphi 0, %s216
      %s218 = sphi 0, %s216
      %s219 = sphi 0, %s218
      %s233 = sphi 0, %s219
      %s237 = sphi 0, %s237
      %s239 = sphi 0, %s237
      %s240 = sphi 0, %s239
      %s254 = sphi 0, %s240
      %s262 = sphi 0, %s264
      %s265 = sphi 0, %s262
      %s266 = sphi 0, %s265
      %s282 = sphi 0, %s266
      %s288 = sphi 0, %s290
      %s291 = sphi 0, %s288
      %s292 = sphi 0, %s291
      %s308 = sphi 0, %s292
      %s314 = sphi 0, %s316
      %s317 = sphi 0, %s314
      %s318 = sphi 0, %s317
      %s334 = sphi 0, %s318
    $region4: #{tpu_custom_call.1} parent=1 // loop_header_branch
      %35 = sbr.rel (%p33) target = $region8
    $region5: #{tpu_custom_call.1} parent=1 // loop_body
      %s37 = ssub.s32 %s32, 1
      %s38 = ssub.s32 %s32, 2
      %s45 = sadd.s32 1, %s40
      %p46 = scmp.ge.s32.totalorder %s45, 8
      %s47 = scalar_select %p46, 0, %s45
      %s48 = sadd.s32 1, %s39
      %s49 = scalar_select %p46, %s48, %s39
      %p50 = scmp.ge.s32.totalorder %s49, 2
      %s51 = scalar_select %p50, 0, %s49
      %s52 = ssub.s32 %s40, %s47
      %s53 = ssub.s32 %s39, %s51
      %s54 = sor.u32 %s52, %s53
      %p55 = scmp.eq.s32.totalorder %s54, 0
      %s57 = sadd.s32 %s56, 1
      %s58 = scalar_select %p55, %s56, %s57
      %p61 = pneg %p55
      %p62 = scmp.eq.s32.totalorder %s32, 15
      %p63 = por %p61, %p62
      %p64 = scmp.ne.s32.totalorder %s56, %s59
      %p65 = scmp.eq.s32.totalorder %s32, 0
      %p66 = por %p64, %p65
      %p67 = scmp.ne.s32.totalorder %s56, %s59
      %p68 = scmp.eq.s32.totalorder %s37, 15
      %p69 = por %p67, %p68
      %p70 = scmp.ne.s32.totalorder %s59, %s60
      %p71 = scmp.eq.s32.totalorder %s37, 0
      %p72 = por %p70, %p71
      %p73 = scmp.ne.s32.totalorder %s59, %s60
      %p74 = scmp.eq.s32.totalorder %s38, 15
      %p75 = por %p73, %p74
      %p77 = scmp.ne.s32.totalorder %s60, %s76
      %p78 = scmp.eq.s32.totalorder %s38, 0
      %p79 = por %p77, %p78
      %s80 = ssub.s32 %s39, %s51
      %p81 = scmp.eq.s32.totalorder %s80, 0
      %s83 = sadd.s32 %s82, 1
      %s84 = scalar_select %p81, %s82, %s83
      %p87 = pneg %p81
      %p88 = scmp.eq.s32.totalorder %s32, 15
      %p89 = por %p87, %p88
      %p90 = scmp.ne.s32.totalorder %s82, %s85
      %p91 = scmp.eq.s32.totalorder %s32, 0
      %p92 = por %p90, %p91
      %p93 = scmp.ne.s32.totalorder %s82, %s85
      %p94 = scmp.eq.s32.totalorder %s37, 15
      %p95 = por %p93, %p94
      %p96 = scmp.ne.s32.totalorder %s85, %s86
      %p97 = scmp.eq.s32.totalorder %s37, 0
      %p98 = por %p96, %p97
      %p99 = scmp.ne.s32.totalorder %s85, %s86
      %p100 = scmp.eq.s32.totalorder %s38, 15
      %p101 = por %p99, %p100
      %p103 = scmp.ne.s32.totalorder %s86, %s102
      %p104 = scmp.eq.s32.totalorder %s38, 0
      %p105 = por %p103, %p104
      %s106 = ssub.s32 %s39, %s51
      %p107 = scmp.eq.s32.totalorder %s106, 0
      %s109 = sadd.s32 %s108, 1
      %s110 = scalar_select %p107, %s108, %s109
      %p113 = pneg %p107
      %p114 = scmp.eq.s32.totalorder %s32, 15
      %p115 = por %p113, %p114
      %p116 = scmp.ne.s32.totalorder %s108, %s111
      %p117 = scmp.eq.s32.totalorder %s32, 0
      %p118 = por %p116, %p117
      %p119 = scmp.ne.s32.totalorder %s108, %s111
      %p120 = scmp.eq.s32.totalorder %s37, 15
      %p121 = por %p119, %p120
      %p122 = scmp.ne.s32.totalorder %s111, %s112
      %p123 = scmp.eq.s32.totalorder %s37, 0
      %p124 = por %p122, %p123
      %p125 = scmp.ne.s32.totalorder %s111, %s112
      %p126 = scmp.eq.s32.totalorder %s38, 15
      %p127 = por %p125, %p126
      %p129 = scmp.ne.s32.totalorder %s112, %s128
      %p130 = scmp.eq.s32.totalorder %s38, 0
      %p131 = por %p129, %p130
      %s133 = sadd.s32 %s132, 1
      %p136 = scmp.eq.s32.totalorder %s32, 15
      %p137 = scmp.ne.s32.totalorder %s132, %s134
      %p138 = scmp.eq.s32.totalorder %s32, 0
      %p139 = por %p137, %p138
      %p140 = scmp.ne.s32.totalorder %s132, %s134
      %p141 = scmp.eq.s32.totalorder %s37, 15
      %p142 = por %p140, %p141
      %p143 = scmp.ne.s32.totalorder %s134, %s135
      %p144 = scmp.eq.s32.totalorder %s37, 0
      %p145 = por %p143, %p144
      %p146 = scmp.ne.s32.totalorder %s134, %s135
      %p147 = scmp.eq.s32.totalorder %s38, 15
      %p148 = por %p146, %p147
      %p150 = scmp.ne.s32.totalorder %s135, %s149
      %p151 = scmp.eq.s32.totalorder %s38, 0
      %p152 = por %p150, %p151
      %s154 = sadd.s32 %s153, 1
      %p157 = scmp.eq.s32.totalorder %s32, 15
      %p158 = scmp.ne.s32.totalorder %s153, %s155
      %p159 = scmp.eq.s32.totalorder %s32, 0
      %p160 = por %p158, %p159
      %p161 = scmp.ne.s32.totalorder %s153, %s155
      %p162 = scmp.eq.s32.totalorder %s37, 15
      %p163 = por %p161, %p162
      %p164 = scmp.ne.s32.totalorder %s155, %s156
      %p165 = scmp.eq.s32.totalorder %s37, 0
      %p166 = por %p164, %p165
      %p167 = scmp.ne.s32.totalorder %s155, %s156
      %p168 = scmp.eq.s32.totalorder %s38, 15
      %p169 = por %p167, %p168
      %p171 = scmp.ne.s32.totalorder %s156, %s170
      %p172 = scmp.eq.s32.totalorder %s38, 0
      %p173 = por %p171, %p172
      %s175 = sadd.s32 %s174, 1
      %p178 = scmp.eq.s32.totalorder %s32, 15
      %p179 = scmp.ne.s32.totalorder %s174, %s176
      %p180 = scmp.eq.s32.totalorder %s32, 0
      %p181 = por %p179, %p180
      %p182 = scmp.ne.s32.totalorder %s174, %s176
      %p183 = scmp.eq.s32.totalorder %s37, 15
      %p184 = por %p182, %p183
      %p185 = scmp.ne.s32.totalorder %s176, %s177
      %p186 = scmp.eq.s32.totalorder %s37, 0
      %p187 = por %p185, %p186
      %p188 = scmp.ne.s32.totalorder %s176, %s177
      %p189 = scmp.eq.s32.totalorder %s38, 15
      %p190 = por %p188, %p189
      %p192 = scmp.ne.s32.totalorder %s177, %s191
      %p193 = scmp.eq.s32.totalorder %s38, 0
      %p194 = por %p192, %p193
      %s196 = sadd.s32 %s195, 1
      %p199 = scmp.eq.s32.totalorder %s32, 15
      %p200 = scmp.ne.s32.totalorder %s195, %s197
      %p201 = scmp.eq.s32.totalorder %s32, 0
      %p202 = por %p200, %p201
      %p203 = scmp.ne.s32.totalorder %s195, %s197
      %p204 = scmp.eq.s32.totalorder %s37, 15
      %p205 = por %p203, %p204
      %p206 = scmp.ne.s32.totalorder %s197, %s198
      %p207 = scmp.eq.s32.totalorder %s37, 0
      %p208 = por %p206, %p207
      %p209 = scmp.ne.s32.totalorder %s197, %s198
      %p210 = scmp.eq.s32.totalorder %s38, 15
      %p211 = por %p209, %p210
      %p213 = scmp.ne.s32.totalorder %s198, %s212
      %p214 = scmp.eq.s32.totalorder %s38, 0
      %p215 = por %p213, %p214
      %s217 = sadd.s32 %s216, 1
      %p220 = scmp.eq.s32.totalorder %s32, 15
      %p221 = scmp.ne.s32.totalorder %s216, %s218
      %p222 = scmp.eq.s32.totalorder %s32, 0
      %p223 = por %p221, %p222
      %p224 = scmp.ne.s32.totalorder %s216, %s218
      %p225 = scmp.eq.s32.totalorder %s37, 15
      %p226 = por %p224, %p225
      %p227 = scmp.ne.s32.totalorder %s218, %s219
      %p228 = scmp.eq.s32.totalorder %s37, 0
      %p229 = por %p227, %p228
      %p230 = scmp.ne.s32.totalorder %s218, %s219
      %p231 = scmp.eq.s32.totalorder %s38, 15
      %p232 = por %p230, %p231
      %p234 = scmp.ne.s32.totalorder %s219, %s233
      %p235 = scmp.eq.s32.totalorder %s38, 0
      %p236 = por %p234, %p235
      %s238 = sadd.s32 %s237, 1
      %p241 = scmp.eq.s32.totalorder %s32, 15
      %p242 = scmp.ne.s32.totalorder %s237, %s239
      %p243 = scmp.eq.s32.totalorder %s32, 0
      %p244 = por %p242, %p243
      %p245 = scmp.ne.s32.totalorder %s237, %s239
      %p246 = scmp.eq.s32.totalorder %s37, 15
      %p247 = por %p245, %p246
      %p248 = scmp.ne.s32.totalorder %s239, %s240
      %p249 = scmp.eq.s32.totalorder %s37, 0
      %p250 = por %p248, %p249
      %p251 = scmp.ne.s32.totalorder %s239, %s240
      %p252 = scmp.eq.s32.totalorder %s38, 15
      %p253 = por %p251, %p252
      %p255 = scmp.ne.s32.totalorder %s240, %s254
      %p256 = scmp.eq.s32.totalorder %s38, 0
      %p257 = por %p255, %p256
      %s258 = ssub.s32 %s40, %s47
      %s259 = ssub.s32 %s39, %s51
      %s260 = sor.u32 %s258, %s259
      %p261 = scmp.eq.s32.totalorder %s260, 0
      %s263 = sadd.s32 %s262, 1
      %s264 = scalar_select %p261, %s262, %s263
      %p267 = pneg %p261
      %p268 = scmp.eq.s32.totalorder %s32, 15
      %p269 = por %p267, %p268
      %p270 = scmp.ne.s32.totalorder %s262, %s265
      %p271 = scmp.eq.s32.totalorder %s32, 0
      %p272 = por %p270, %p271
      %p273 = scmp.ne.s32.totalorder %s262, %s265
      %p274 = scmp.eq.s32.totalorder %s37, 15
      %p275 = por %p273, %p274
      %p276 = scmp.ne.s32.totalorder %s265, %s266
      %p277 = scmp.eq.s32.totalorder %s37, 0
      %p278 = por %p276, %p277
      %p279 = scmp.ne.s32.totalorder %s265, %s266
      %p280 = scmp.eq.s32.totalorder %s38, 15
      %p281 = por %p279, %p280
      %p283 = scmp.ne.s32.totalorder %s266, %s282
      %p284 = scmp.eq.s32.totalorder %s38, 0
      %p285 = por %p283, %p284
      %s286 = ssub.s32 %s39, %s51
      %p287 = scmp.eq.s32.totalorder %s286, 0
      %s289 = sadd.s32 %s288, 1
      %s290 = scalar_select %p287, %s288, %s289
      %p293 = pneg %p287
      %p294 = scmp.eq.s32.totalorder %s32, 15
      %p295 = por %p293, %p294
      %p296 = scmp.ne.s32.totalorder %s288, %s291
      %p297 = scmp.eq.s32.totalorder %s32, 0
      %p298 = por %p296, %p297
      %p299 = scmp.ne.s32.totalorder %s288, %s291
      %p300 = scmp.eq.s32.totalorder %s37, 15
      %p301 = por %p299, %p300
      %p302 = scmp.ne.s32.totalorder %s291, %s292
      %p303 = scmp.eq.s32.totalorder %s37, 0
      %p304 = por %p302, %p303
      %p305 = scmp.ne.s32.totalorder %s291, %s292
      %p306 = scmp.eq.s32.totalorder %s38, 15
      %p307 = por %p305, %p306
      %p309 = scmp.ne.s32.totalorder %s292, %s308
      %p310 = scmp.eq.s32.totalorder %s38, 0
      %p311 = por %p309, %p310
      %s312 = ssub.s32 %s39, %s51
      %p313 = scmp.eq.s32.totalorder %s312, 0
      %s315 = sadd.s32 %s314, 1
      %s316 = scalar_select %p313, %s314, %s315
      %p319 = pneg %p313
      %p320 = scmp.eq.s32.totalorder %s32, 15
      %p321 = por %p319, %p320
      %p322 = scmp.ne.s32.totalorder %s314, %s317
      %p323 = scmp.eq.s32.totalorder %s32, 0
      %p324 = por %p322, %p323
      %p325 = scmp.ne.s32.totalorder %s314, %s317
      %p326 = scmp.eq.s32.totalorder %s37, 15
      %p327 = por %p325, %p326
      %p328 = scmp.ne.s32.totalorder %s317, %s318
      %p329 = scmp.eq.s32.totalorder %s37, 0
      %p330 = por %p328, %p329
      %p331 = scmp.ne.s32.totalorder %s317, %s318
      %p332 = scmp.eq.s32.totalorder %s38, 15
      %p333 = por %p331, %p332
      %p335 = scmp.ne.s32.totalorder %s318, %s334
      %p336 = scmp.eq.s32.totalorder %s38, 0
      %p337 = por %p335, %p336
      %p338 = scmp.le.s32.totalorder 1, %s32
      %p339 = scmp.lt.s32.totalorder %s32, 17
      %p340 = pnand %p338, %p339
      %p341 = pneg %p340
      // Predicated region
      $region9: #{tpu_custom_call.1} parent=5 // pred_check
        _
      $region10: #{tpu_custom_call.1} parent=5 // pred_check_branch
        %343 = sbr.rel (%p340) target = $region12
      $region11: #{tpu_custom_call.1} parent=5 // pred_region
        %s344 = ssub.s32 %s32, 1
        // Predicated region
        $region13: #{tpu_custom_call.1} parent=11 // pred_check
          %p345 = pneg %p145
        $region14: #{tpu_custom_call.1} parent=11 // pred_check_branch
          %347 = sbr.rel (%p345) target = $region16
        $region15: #{tpu_custom_call.1} parent=11 // pred_region
          %s349 = ssub.s32 32768, 32768
          %350 = vsyncadd [#allocation11], %s349
          %s351 = sshll.u32 [#allocation10], 4
          %s352 = int_to_ptr.vmem [resolvable:$true] %s351
          %357 = dma.hbm_to_vmem [thread:$0]  %s3, 32768, %s352, [#allocation11], 1024, 1024, 64
        $region16: #{tpu_custom_call.1} parent=11 // pred_fallthru
          _
        // Predicated region
        $region17: #{tpu_custom_call.1} parent=11 // pred_check
          %p358 = pneg %p166
        $region18: #{tpu_custom_call.1} parent=11 // pred_check_branch
          %360 = sbr.rel (%p358) target = $region20
        $region19: #{tpu_custom_call.1} parent=11 // pred_region
          _
        $region20: #{tpu_custom_call.1} parent=11 // pred_fallthru
          _
        // Predicated region
        $region21: #{tpu_custom_call.1} parent=11 // pred_check
          %p361 = pneg %p187
        $region22: #{tpu_custom_call.1} parent=11 // pred_check_branch
          %363 = sbr.rel (%p361) target = $region24
        $region23: #{tpu_custom_call.1} parent=11 // pred_region
          %s365 = ssub.s32 2048, 2048
          %366 = vsyncadd [#allocation11], %s365
          %s367 = sshll.u32 [#allocation12], 4
          %s368 = int_to_ptr.vmem [resolvable:$true] %s367
          %373 = dma.hbm_to_vmem [thread:$0]  %s5, 2048, %s368, [#allocation11], 64, 64, 4
        $region24: #{tpu_custom_call.1} parent=11 // pred_fallthru
          _
        // Predicated region
        $region25: #{tpu_custom_call.1} parent=11 // pred_check
          %p374 = pneg %p208
        $region26: #{tpu_custom_call.1} parent=11 // pred_check_branch
          %376 = sbr.rel (%p374) target = $region28
        $region27: #{tpu_custom_call.1} parent=11 // pred_region
          _
        $region28: #{tpu_custom_call.1} parent=11 // pred_fallthru
          _
        // Predicated region
        $region29: #{tpu_custom_call.1} parent=11 // pred_check
          %p377 = pneg %p229
        $region30: #{tpu_custom_call.1} parent=11 // pred_check_branch
          %379 = sbr.rel (%p377) target = $region32
        $region31: #{tpu_custom_call.1} parent=11 // pred_region
          %s381 = ssub.s32 1024, 1024
          %382 = vsyncadd [#allocation14], %s381
          %s383 = sshll.u32 [#allocation13], 4
          %s384 = int_to_ptr.vmem [resolvable:$true] %s383
          %389 = dma.hbm_to_vmem [thread:$0]  %s7, 1024, %s384, [#allocation14], 64, 64, 4
        $region32: #{tpu_custom_call.1} parent=11 // pred_fallthru
          _
        // Predicated region
        $region33: #{tpu_custom_call.1} parent=11 // pred_check
          %p390 = pneg %p250
        $region34: #{tpu_custom_call.1} parent=11 // pred_check_branch
          %392 = sbr.rel (%p390) target = $region36
        $region35: #{tpu_custom_call.1} parent=11 // pred_region
          _
        $region36: #{tpu_custom_call.1} parent=11 // pred_fallthru
          _
      $region12: #{tpu_custom_call.1} parent=5 // pred_fallthru
        _
      %p393 = scmp.lt.s32.totalorder %s32, 16
      // Predicated region
      $region37: #{tpu_custom_call.1} parent=5 // pred_check
        %p394 = pneg %p393
      $region38: #{tpu_custom_call.1} parent=5 // pred_check_branch
        %396 = sbr.rel (%p394) target = $region40
      $region39: #{tpu_custom_call.1} parent=5 // pred_region
        // Predicated region
        $region41: #{tpu_custom_call.1} parent=39 // pred_check
          %p397 = pneg %p66
        $region42: #{tpu_custom_call.1} parent=39 // pred_check_branch
          %399 = sbr.rel (%p397) target = $region44
        $region43: #{tpu_custom_call.1} parent=39 // pred_region
          %s400 = sand.u32 %s56, 1
          %s401 = scalar_lea.sflag [#allocation5], %s400
          %s402 = sand.u32 %s56, 1
          %s403 = smul.addr %s402, 64
          %s404 = scalar_lea.vmem [#allocation4], %s403
          %s406 = ssub.s32 1024, 1024
          %407 = vsyncadd %s401, %s406
          %s408 = smul.addr %s39, 8
          %s409 = smul.addr %s40, 16
          %s410 = sadd.s32 %s408, %s409
          %s411 = smul.addr %s410, 128
          %s412 = scalar_lea.hbm %s0, %s411
          %s414 = sshll.u32 %s404, 4
          %s415 = int_to_ptr.vmem [resolvable:$true] %s414
          %417 = dma.hbm_to_vmem [thread:$0]  %s412, 1024, %s415, %s401
        $region44: #{tpu_custom_call.1} parent=39 // pred_fallthru
          _
        // Predicated region
        $region45: #{tpu_custom_call.1} parent=39 // pred_check
          %p418 = pneg %p92
        $region46: #{tpu_custom_call.1} parent=39 // pred_check_branch
          %420 = sbr.rel (%p418) target = $region48
        $region47: #{tpu_custom_call.1} parent=39 // pred_region
          %s421 = sand.u32 %s32, 1
          %s422 = scalar_lea.sflag [#allocation8], %s421
          %s423 = sand.u32 %s82, 1
          %s424 = smul.addr %s423, 16
          %s425 = scalar_lea.vmem [#allocation7], %s424
          %s427 = ssub.s32 256, 256
          %428 = vsyncadd %s422, %s427
          %s429 = smul.addr %s39, 2
          %s430 = smul.addr %s429, 128
          %s431 = scalar_lea.hbm %s1, %s430
          %s433 = sshll.u32 %s425, 4
          %s434 = int_to_ptr.vmem [resolvable:$true] %s433
          %436 = dma.hbm_to_vmem [thread:$0]  %s431, 256, %s434, %s422
        $region48: #{tpu_custom_call.1} parent=39 // pred_fallthru
          _
        // Predicated region
        $region49: #{tpu_custom_call.1} parent=39 // pred_check
          %p437 = pneg %p118
        $region50: #{tpu_custom_call.1} parent=39 // pred_check_branch
          %439 = sbr.rel (%p437) target = $region52
        $region51: #{tpu_custom_call.1} parent=39 // pred_region
          %s440 = sand.u32 %s32, 1
          %s441 = scalar_lea.sflag [#allocation8], %s440
          %s442 = sand.u32 %s108, 1
          %s443 = smul.addr %s442, 16
          %s444 = scalar_lea.vmem [#allocation9], %s443
          %s446 = ssub.s32 256, 256
          %447 = vsyncadd %s441, %s446
          %s448 = smul.addr %s39, 2
          %s449 = smul.addr %s448, 128
          %s450 = scalar_lea.hbm %s2, %s449
          %s452 = sshll.u32 %s444, 4
          %s453 = int_to_ptr.vmem [resolvable:$true] %s452
          %455 = dma.hbm_to_vmem [thread:$0]  %s450, 256, %s453, %s441
        $region52: #{tpu_custom_call.1} parent=39 // pred_fallthru
          _
      $region40: #{tpu_custom_call.1} parent=5 // pred_fallthru
        _
      %p456 = scmp.le.s32.totalorder 1, %s32
      %p457 = scmp.lt.s32.totalorder %s32, 17
      %p458 = pnand %p456, %p457
      %p459 = pneg %p458
      // Predicated region
      $region53: #{tpu_custom_call.1} parent=5 // pred_check
        _
      $region54: #{tpu_custom_call.1} parent=5 // pred_check_branch
        %461 = sbr.rel (%p458) target = $region56
      $region55: #{tpu_custom_call.1} parent=5 // pred_region
        %s462 = ssub.s32 %s32, 1
        %s463 = sand.u32 %s59, 1
        %s464 = scalar_lea.sflag [#allocation5], %s463
        %s465 = sand.u32 %s59, 1
        %s466 = smul.addr %s465, 64
        %s467 = scalar_lea.vmem [#allocation4], %s466
        // Predicated region
        $region57: #{tpu_custom_call.1} parent=55 // pred_check
          %p468 = pneg %p72
        $region58: #{tpu_custom_call.1} parent=55 // pred_check_branch
          %470 = sbr.rel (%p468) target = $region60
        $region59: #{tpu_custom_call.1} parent=55 // pred_region
          %471 = dma.done %s464, 1024
        $region60: #{tpu_custom_call.1} parent=55 // pred_fallthru
          _
        %s472 = sand.u32 %s37, 1
        %s473 = scalar_lea.sflag [#allocation8], %s472
        %s474 = sand.u32 %s85, 1
        %s475 = smul.addr %s474, 16
        %s476 = scalar_lea.vmem [#allocation7], %s475
        // Predicated region
        $region61: #{tpu_custom_call.1} parent=55 // pred_check
          %p477 = pneg %p98
        $region62: #{tpu_custom_call.1} parent=55 // pred_check_branch
          %479 = sbr.rel (%p477) target = $region64
        $region63: #{tpu_custom_call.1} parent=55 // pred_region
          %480 = dma.done %s473, 256
        $region64: #{tpu_custom_call.1} parent=55 // pred_fallthru
          _
        %s481 = sand.u32 %s37, 1
        %s482 = scalar_lea.sflag [#allocation8], %s481
        %s483 = sand.u32 %s111, 1
        %s484 = smul.addr %s483, 16
        %s485 = scalar_lea.vmem [#allocation9], %s484
        // Predicated region
        $region65: #{tpu_custom_call.1} parent=55 // pred_check
          %p486 = pneg %p124
        $region66: #{tpu_custom_call.1} parent=55 // pred_check_branch
          %488 = sbr.rel (%p486) target = $region68
        $region67: #{tpu_custom_call.1} parent=55 // pred_region
          %489 = dma.done %s482, 256
        $region68: #{tpu_custom_call.1} parent=55 // pred_fallthru
          _
        // Predicated region
        $region69: #{tpu_custom_call.1} parent=55 // pred_check
          %p490 = pneg %p145
        $region70: #{tpu_custom_call.1} parent=55 // pred_check_branch
          %492 = sbr.rel (%p490) target = $region72
        $region71: #{tpu_custom_call.1} parent=55 // pred_region
          %493 = dma.done [#allocation11], 32768
        $region72: #{tpu_custom_call.1} parent=55 // pred_fallthru
          _
        // Predicated region
        $region73: #{tpu_custom_call.1} parent=55 // pred_check
          %p494 = pneg %p187
        $region74: #{tpu_custom_call.1} parent=55 // pred_check_branch
          %496 = sbr.rel (%p494) target = $region76
        $region75: #{tpu_custom_call.1} parent=55 // pred_region
          %497 = dma.done [#allocation11], 2048
        $region76: #{tpu_custom_call.1} parent=55 // pred_fallthru
          _
        // Predicated region
        $region77: #{tpu_custom_call.1} parent=55 // pred_check
          %p498 = pneg %p229
        $region78: #{tpu_custom_call.1} parent=55 // pred_check_branch
          %500 = sbr.rel (%p498) target = $region80
        $region79: #{tpu_custom_call.1} parent=55 // pred_region
          %501 = dma.done [#allocation14], 1024
        $region80: #{tpu_custom_call.1} parent=55 // pred_fallthru
          _
        %s502 = sand.u32 %s59, 1
        %s503 = scalar_lea.sflag [#allocation5], %s502
        %s504 = sand.u32 %s59, 1
        %s505 = smul.addr %s504, 64
        %s506 = scalar_lea.vmem [#allocation4], %s505
        %p507 = pneg %p72
        %p508 = pneg %p69
        %s509 = sand.u32 %s37, 1
        %s510 = scalar_lea.sflag [#allocation8], %s509
        %s511 = sand.u32 %s85, 1
        %s512 = smul.addr %s511, 16
        %s513 = scalar_lea.vmem [#allocation7], %s512
        %p514 = pneg %p98
        %p515 = pneg %p95
        %s516 = sand.u32 %s37, 1
        %s517 = scalar_lea.sflag [#allocation8], %s516
        %s518 = sand.u32 %s111, 1
        %s519 = smul.addr %s518, 16
        %s520 = scalar_lea.vmem [#allocation9], %s519
        %p521 = pneg %p124
        %p522 = pneg %p121
        %p523 = pneg %p145
        %p524 = pneg %p142
        %p525 = pneg %p166
        %p526 = pneg %p163
        %p527 = pneg %p187
        %p528 = pneg %p184
        %p529 = pneg %p208
        %p530 = pneg %p205
        %p531 = pneg %p229
        %p532 = pneg %p226
        %p533 = pneg %p250
        %p534 = pneg %p247
        %p535 = pneg %p278
        %p536 = pneg %p275
        %s537 = sand.u32 %s265, 1
        %s538 = scalar_lea.sflag [#allocation6], %s537
        %s539 = sand.u32 %s265, 1
        %s540 = smul.addr %s539, 8
        %s541 = scalar_lea.vmem [#allocation15], %s540
        %p542 = pneg %p304
        %p543 = pneg %p301
        %s544 = sand.u32 %s37, 1
        %s545 = scalar_lea.sflag [#allocation17], %s544
        %s546 = sand.u32 %s291, 1
        %s547 = smul.addr %s546, 16
        %s548 = scalar_lea.vmem [#allocation16], %s547
        %p549 = pneg %p330
        %p550 = pneg %p327
        %s551 = sand.u32 %s37, 1
        %s552 = scalar_lea.sflag [#allocation17], %s551
        %s553 = sand.u32 %s317, 1
        %s554 = smul.addr %s553, 16
        %s555 = scalar_lea.vmem [#allocation18], %s554
        %p557 = scmp.eq.s32.totalorder %s42, 0
        // Predicated region
        $region81: #{tpu_custom_call.1} parent=55 // pred_check
          %p558 = pneg %p557
        $region82: #{tpu_custom_call.1} parent=55 // pred_check_branch
          %560 = sbr.rel (%p558) target = $region84
        $region83: #{tpu_custom_call.1} parent=55 // pred_region
          %v561 = vld [vmem:[%s476] sm:$0xff]
          %v562 = vld [vmem:[%s476 + $0x8] sm:$0xff]
          %563 = vst [vmem:[#allocation2] sm:$0xff] %v561
          %564 = vst [vmem:[#allocation2 + $0x8] sm:$0xff] %v562
          %v565 = vld [vmem:[%s485] sm:$0xff]
          %v566 = vld [vmem:[%s485 + $0x8] sm:$0xff]
          %567 = vst [vmem:[#allocation3] sm:$0xff] %v565
          %568 = vst [vmem:[#allocation3 + $0x8] sm:$0xff] %v566
        $region84: #{tpu_custom_call.1} parent=55 // pred_fallthru
          _
        %v569 = vld [vmem:[#allocation2] sm:$0xff]
        %v570 = vld [vmem:[#allocation2 + $0x8] sm:$0xff]
        %v571 = vld [vmem:[#allocation3] sm:$0xff]
        %v572 = vld [vmem:[#allocation3 + $0x8] sm:$0xff]
        %v573 = vld [vmem:[%s467] sm:$0xff]
        %v574 = vld [vmem:[%s467 + $0x8] sm:$0xff]
        %v575 = vld [vmem:[%s467 + $0x10] sm:$0xff]
        %v576 = vld [vmem:[%s467 + $0x18] sm:$0xff]
        %v577 = vld [vmem:[%s467 + $0x20] sm:$0xff]
        %v578 = vld [vmem:[%s467 + $0x28] sm:$0xff]
        %v579 = vld [vmem:[%s467 + $0x30] sm:$0xff]
        %v580 = vld [vmem:[%s467 + $0x38] sm:$0xff]
        %v581 = vld [vmem:[#allocation10] sm:$0xff]
        %v582 = vld [vmem:[#allocation10 + $0x8] sm:$0xff]
        %v583 = vld [vmem:[#allocation10 + $0x10] sm:$0xff]
        %v584 = vld [vmem:[#allocation10 + $0x18] sm:$0xff]
        %v585 = vld [vmem:[#allocation10 + $0x20] sm:$0xff]
        %v586 = vld [vmem:[#allocation10 + $0x28] sm:$0xff]
        %v587 = vld [vmem:[#allocation10 + $0x30] sm:$0xff]
        %v588 = vld [vmem:[#allocation10 + $0x38] sm:$0xff]
        %v589 = vld [vmem:[#allocation10 + $0x40] sm:$0xff]
        %v590 = vld [vmem:[#allocation10 + $0x48] sm:$0xff]
        %v591 = vld [vmem:[#allocation10 + $0x50] sm:$0xff]
        %v592 = vld [vmem:[#allocation10 + $0x58] sm:$0xff]
        %v593 = vld [vmem:[#allocation10 + $0x60] sm:$0xff]
        %v594 = vld [vmem:[#allocation10 + $0x68] sm:$0xff]
        %v595 = vld [vmem:[#allocation10 + $0x70] sm:$0xff]
        %v596 = vld [vmem:[#allocation10 + $0x78] sm:$0xff]
        %v597 = vld [vmem:[#allocation10 + $0x80] sm:$0xff]
        %v598 = vld [vmem:[#allocation10 + $0x88] sm:$0xff]
        %v599 = vld [vmem:[#allocation10 + $0x90] sm:$0xff]
        %v600 = vld [vmem:[#allocation10 + $0x98] sm:$0xff]
        %v601 = vld [vmem:[#allocation10 + $0xa0] sm:$0xff]
        %v602 = vld [vmem:[#allocation10 + $0xa8] sm:$0xff]
        %v603 = vld [vmem:[#allocation10 + $0xb0] sm:$0xff]
        %v604 = vld [vmem:[#allocation10 + $0xb8] sm:$0xff]
        %v605 = vld [vmem:[#allocation10 + $0xc0] sm:$0xff]
        %v606 = vld [vmem:[#allocation10 + $0xc8] sm:$0xff]
        %v607 = vld [vmem:[#allocation10 + $0xd0] sm:$0xff]
        %v608 = vld [vmem:[#allocation10 + $0xd8] sm:$0xff]
        %v609 = vld [vmem:[#allocation10 + $0xe0] sm:$0xff]
        %v610 = vld [vmem:[#allocation10 + $0xe8] sm:$0xff]
        %v611 = vld [vmem:[#allocation10 + $0xf0] sm:$0xff]
        %v612 = vld [vmem:[#allocation10 + $0xf8] sm:$0xff]
        %v613 = vld [vmem:[#allocation10 + $0x100] sm:$0xff]
        %v614 = vld [vmem:[#allocation10 + $0x108] sm:$0xff]
        %v615 = vld [vmem:[#allocation10 + $0x110] sm:$0xff]
        %v616 = vld [vmem:[#allocation10 + $0x118] sm:$0xff]
        %v617 = vld [vmem:[#allocation10 + $0x120] sm:$0xff]
        %v618 = vld [vmem:[#allocation10 + $0x128] sm:$0xff]
        %v619 = vld [vmem:[#allocation10 + $0x130] sm:$0xff]
        %v620 = vld [vmem:[#allocation10 + $0x138] sm:$0xff]
        %v621 = vld [vmem:[#allocation10 + $0x140] sm:$0xff]
        %v622 = vld [vmem:[#allocation10 + $0x148] sm:$0xff]
        %v623 = vld [vmem:[#allocation10 + $0x150] sm:$0xff]
        %v624 = vld [vmem:[#allocation10 + $0x158] sm:$0xff]
        %v625 = vld [vmem:[#allocation10 + $0x160] sm:$0xff]
        %v626 = vld [vmem:[#allocation10 + $0x168] sm:$0xff]
        %v627 = vld [vmem:[#allocation10 + $0x170] sm:$0xff]
        %v628 = vld [vmem:[#allocation10 + $0x178] sm:$0xff]
        %v629 = vld [vmem:[#allocation10 + $0x180] sm:$0xff]
        %v630 = vld [vmem:[#allocation10 + $0x188] sm:$0xff]
        %v631 = vld [vmem:[#allocation10 + $0x190] sm:$0xff]
        %v632 = vld [vmem:[#allocation10 + $0x198] sm:$0xff]
        %v633 = vld [vmem:[#allocation10 + $0x1a0] sm:$0xff]
        %v634 = vld [vmem:[#allocation10 + $0x1a8] sm:$0xff]
        %v635 = vld [vmem:[#allocation10 + $0x1b0] sm:$0xff]
        %v636 = vld [vmem:[#allocation10 + $0x1b8] sm:$0xff]
        %v637 = vld [vmem:[#allocation10 + $0x1c0] sm:$0xff]
        %v638 = vld [vmem:[#allocation10 + $0x1c8] sm:$0xff]
        %v639 = vld [vmem:[#allocation10 + $0x1d0] sm:$0xff]
        %v640 = vld [vmem:[#allocation10 + $0x1d8] sm:$0xff]
        %v641 = vld [vmem:[#allocation10 + $0x1e0] sm:$0xff]
        %v642 = vld [vmem:[#allocation10 + $0x1e8] sm:$0xff]
        %v643 = vld [vmem:[#allocation10 + $0x1f0] sm:$0xff]
        %v644 = vld [vmem:[#allocation10 + $0x1f8] sm:$0xff]
        %v645 = vld [vmem:[#allocation10 + $0x200] sm:$0xff]
        %v646 = vld [vmem:[#allocation10 + $0x208] sm:$0xff]
        %v647 = vld [vmem:[#allocation10 + $0x210] sm:$0xff]
        %v648 = vld [vmem:[#allocation10 + $0x218] sm:$0xff]
        %v649 = vld [vmem:[#allocation10 + $0x220] sm:$0xff]
        %v650 = vld [vmem:[#allocation10 + $0x228] sm:$0xff]
        %v651 = vld [vmem:[#allocation10 + $0x230] sm:$0xff]
        %v652 = vld [vmem:[#allocation10 + $0x238] sm:$0xff]
        %v653 = vld [vmem:[#allocation10 + $0x240] sm:$0xff]
        %v654 = vld [vmem:[#allocation10 + $0x248] sm:$0xff]
        %v655 = vld [vmem:[#allocation10 + $0x250] sm:$0xff]
        %v656 = vld [vmem:[#allocation10 + $0x258] sm:$0xff]
        %v657 = vld [vmem:[#allocation10 + $0x260] sm:$0xff]
        %v658 = vld [vmem:[#allocation10 + $0x268] sm:$0xff]
        %v659 = vld [vmem:[#allocation10 + $0x270] sm:$0xff]
        %v660 = vld [vmem:[#allocation10 + $0x278] sm:$0xff]
        %v661 = vld [vmem:[#allocation10 + $0x280] sm:$0xff]
        %v662 = vld [vmem:[#allocation10 + $0x288] sm:$0xff]
        %v663 = vld [vmem:[#allocation10 + $0x290] sm:$0xff]
        %v664 = vld [vmem:[#allocation10 + $0x298] sm:$0xff]
        %v665 = vld [vmem:[#allocation10 + $0x2a0] sm:$0xff]
        %v666 = vld [vmem:[#allocation10 + $0x2a8] sm:$0xff]
        %v667 = vld [vmem:[#allocation10 + $0x2b0] sm:$0xff]
        %v668 = vld [vmem:[#allocation10 + $0x2b8] sm:$0xff]
        %v669 = vld [vmem:[#allocation10 + $0x2c0] sm:$0xff]
        %v670 = vld [vmem:[#allocation10 + $0x2c8] sm:$0xff]
        %v671 = vld [vmem:[#allocation10 + $0x2d0] sm:$0xff]
        %v672 = vld [vmem:[#allocation10 + $0x2d8] sm:$0xff]
        %v673 = vld [vmem:[#allocation10 + $0x2e0] sm:$0xff]
        %v674 = vld [vmem:[#allocation10 + $0x2e8] sm:$0xff]
        %v675 = vld [vmem:[#allocation10 + $0x2f0] sm:$0xff]
        %v676 = vld [vmem:[#allocation10 + $0x2f8] sm:$0xff]
        %v677 = vld [vmem:[#allocation10 + $0x300] sm:$0xff]
        %v678 = vld [vmem:[#allocation10 + $0x308] sm:$0xff]
        %v679 = vld [vmem:[#allocation10 + $0x310] sm:$0xff]
        %v680 = vld [vmem:[#allocation10 + $0x318] sm:$0xff]
        %v681 = vld [vmem:[#allocation10 + $0x320] sm:$0xff]
        %v682 = vld [vmem:[#allocation10 + $0x328] sm:$0xff]
        %v683 = vld [vmem:[#allocation10 + $0x330] sm:$0xff]
        %v684 = vld [vmem:[#allocation10 + $0x338] sm:$0xff]
        %v685 = vld [vmem:[#allocation10 + $0x340] sm:$0xff]
        %v686 = vld [vmem:[#allocation10 + $0x348] sm:$0xff]
        %v687 = vld [vmem:[#allocation10 + $0x350] sm:$0xff]
        %v688 = vld [vmem:[#allocation10 + $0x358] sm:$0xff]
        %v689 = vld [vmem:[#allocation10 + $0x360] sm:$0xff]
        %v690 = vld [vmem:[#allocation10 + $0x368] sm:$0xff]
        %v691 = vld [vmem:[#allocation10 + $0x370] sm:$0xff]
        %v692 = vld [vmem:[#allocation10 + $0x378] sm:$0xff]
        %v693 = vld [vmem:[#allocation10 + $0x380] sm:$0xff]
        %v694 = vld [vmem:[#allocation10 + $0x388] sm:$0xff]
        %v695 = vld [vmem:[#allocation10 + $0x390] sm:$0xff]
        %v696 = vld [vmem:[#allocation10 + $0x398] sm:$0xff]
        %v697 = vld [vmem:[#allocation10 + $0x3a0] sm:$0xff]
        %v698 = vld [vmem:[#allocation10 + $0x3a8] sm:$0xff]
        %v699 = vld [vmem:[#allocation10 + $0x3b0] sm:$0xff]
        %v700 = vld [vmem:[#allocation10 + $0x3b8] sm:$0xff]
        %v701 = vld [vmem:[#allocation10 + $0x3c0] sm:$0xff]
        %v702 = vld [vmem:[#allocation10 + $0x3c8] sm:$0xff]
        %v703 = vld [vmem:[#allocation10 + $0x3d0] sm:$0xff]
        %v704 = vld [vmem:[#allocation10 + $0x3d8] sm:$0xff]
        %v705 = vld [vmem:[#allocation10 + $0x3e0] sm:$0xff]
        %v706 = vld [vmem:[#allocation10 + $0x3e8] sm:$0xff]
        %v707 = vld [vmem:[#allocation10 + $0x3f0] sm:$0xff]
        %v708 = vld [vmem:[#allocation10 + $0x3f8] sm:$0xff]
        %v709 = vld [vmem:[#allocation10 + $0x400] sm:$0xff]
        %v710 = vld [vmem:[#allocation10 + $0x408] sm:$0xff]
        %v711 = vld [vmem:[#allocation10 + $0x410] sm:$0xff]
        %v712 = vld [vmem:[#allocation10 + $0x418] sm:$0xff]
        %v713 = vld [vmem:[#allocation10 + $0x420] sm:$0xff]
        %v714 = vld [vmem:[#allocation10 + $0x428] sm:$0xff]
        %v715 = vld [vmem:[#allocation10 + $0x430] sm:$0xff]
        %v716 = vld [vmem:[#allocation10 + $0x438] sm:$0xff]
        %v717 = vld [vmem:[#allocation10 + $0x440] sm:$0xff]
        %v718 = vld [vmem:[#allocation10 + $0x448] sm:$0xff]
        %v719 = vld [vmem:[#allocation10 + $0x450] sm:$0xff]
        %v720 = vld [vmem:[#allocation10 + $0x458] sm:$0xff]
        %v721 = vld [vmem:[#allocation10 + $0x460] sm:$0xff]
        %v722 = vld [vmem:[#allocation10 + $0x468] sm:$0xff]
        %v723 = vld [vmem:[#allocation10 + $0x470] sm:$0xff]
        %v724 = vld [vmem:[#allocation10 + $0x478] sm:$0xff]
        %v725 = vld [vmem:[#allocation10 + $0x480] sm:$0xff]
        %v726 = vld [vmem:[#allocation10 + $0x488] sm:$0xff]
        %v727 = vld [vmem:[#allocation10 + $0x490] sm:$0xff]
        %v728 = vld [vmem:[#allocation10 + $0x498] sm:$0xff]
        %v729 = vld [vmem:[#allocation10 + $0x4a0] sm:$0xff]
        %v730 = vld [vmem:[#allocation10 + $0x4a8] sm:$0xff]
        %v731 = vld [vmem:[#allocation10 + $0x4b0] sm:$0xff]
        %v732 = vld [vmem:[#allocation10 + $0x4b8] sm:$0xff]
        %v733 = vld [vmem:[#allocation10 + $0x4c0] sm:$0xff]
        %v734 = vld [vmem:[#allocation10 + $0x4c8] sm:$0xff]
        %v735 = vld [vmem:[#allocation10 + $0x4d0] sm:$0xff]
        %v736 = vld [vmem:[#allocation10 + $0x4d8] sm:$0xff]
        %v737 = vld [vmem:[#allocation10 + $0x4e0] sm:$0xff]
        %v738 = vld [vmem:[#allocation10 + $0x4e8] sm:$0xff]
        %v739 = vld [vmem:[#allocation10 + $0x4f0] sm:$0xff]
        %v740 = vld [vmem:[#allocation10 + $0x4f8] sm:$0xff]
        %v741 = vld [vmem:[#allocation10 + $0x500] sm:$0xff]
        %v742 = vld [vmem:[#allocation10 + $0x508] sm:$0xff]
        %v743 = vld [vmem:[#allocation10 + $0x510] sm:$0xff]
        %v744 = vld [vmem:[#allocation10 + $0x518] sm:$0xff]
        %v745 = vld [vmem:[#allocation10 + $0x520] sm:$0xff]
        %v746 = vld [vmem:[#allocation10 + $0x528] sm:$0xff]
        %v747 = vld [vmem:[#allocation10 + $0x530] sm:$0xff]
        %v748 = vld [vmem:[#allocation10 + $0x538] sm:$0xff]
        %v749 = vld [vmem:[#allocation10 + $0x540] sm:$0xff]
        %v750 = vld [vmem:[#allocation10 + $0x548] sm:$0xff]
        %v751 = vld [vmem:[#allocation10 + $0x550] sm:$0xff]
        %v752 = vld [vmem:[#allocation10 + $0x558] sm:$0xff]
        %v753 = vld [vmem:[#allocation10 + $0x560] sm:$0xff]
        %v754 = vld [vmem:[#allocation10 + $0x568] sm:$0xff]
        %v755 = vld [vmem:[#allocation10 + $0x570] sm:$0xff]
        %v756 = vld [vmem:[#allocation10 + $0x578] sm:$0xff]
        %v757 = vld [vmem:[#allocation10 + $0x580] sm:$0xff]
        %v758 = vld [vmem:[#allocation10 + $0x588] sm:$0xff]
        %v759 = vld [vmem:[#allocation10 + $0x590] sm:$0xff]
        %v760 = vld [vmem:[#allocation10 + $0x598] sm:$0xff]
        %v761 = vld [vmem:[#allocation10 + $0x5a0] sm:$0xff]
        %v762 = vld [vmem:[#allocation10 + $0x5a8] sm:$0xff]
        %v763 = vld [vmem:[#allocation10 + $0x5b0] sm:$0xff]
        %v764 = vld [vmem:[#allocation10 + $0x5b8] sm:$0xff]
        %v765 = vld [vmem:[#allocation10 + $0x5c0] sm:$0xff]
        %v766 = vld [vmem:[#allocation10 + $0x5c8] sm:$0xff]
        %v767 = vld [vmem:[#allocation10 + $0x5d0] sm:$0xff]
        %v768 = vld [vmem:[#allocation10 + $0x5d8] sm:$0xff]
        %v769 = vld [vmem:[#allocation10 + $0x5e0] sm:$0xff]
        %v770 = vld [vmem:[#allocation10 + $0x5e8] sm:$0xff]
        %v771 = vld [vmem:[#allocation10 + $0x5f0] sm:$0xff]
        %v772 = vld [vmem:[#allocation10 + $0x5f8] sm:$0xff]
        %v773 = vld [vmem:[#allocation10 + $0x600] sm:$0xff]
        %v774 = vld [vmem:[#allocation10 + $0x608] sm:$0xff]
        %v775 = vld [vmem:[#allocation10 + $0x610] sm:$0xff]
        %v776 = vld [vmem:[#allocation10 + $0x618] sm:$0xff]
        %v777 = vld [vmem:[#allocation10 + $0x620] sm:$0xff]
        %v778 = vld [vmem:[#allocation10 + $0x628] sm:$0xff]
        %v779 = vld [vmem:[#allocation10 + $0x630] sm:$0xff]
        %v780 = vld [vmem:[#allocation10 + $0x638] sm:$0xff]
        %v781 = vld [vmem:[#allocation10 + $0x640] sm:$0xff]
        %v782 = vld [vmem:[#allocation10 + $0x648] sm:$0xff]
        %v783 = vld [vmem:[#allocation10 + $0x650] sm:$0xff]
        %v784 = vld [vmem:[#allocation10 + $0x658] sm:$0xff]
        %v785 = vld [vmem:[#allocation10 + $0x660] sm:$0xff]
        %v786 = vld [vmem:[#allocation10 + $0x668] sm:$0xff]
        %v787 = vld [vmem:[#allocation10 + $0x670] sm:$0xff]
        %v788 = vld [vmem:[#allocation10 + $0x678] sm:$0xff]
        %v789 = vld [vmem:[#allocation10 + $0x680] sm:$0xff]
        %v790 = vld [vmem:[#allocation10 + $0x688] sm:$0xff]
        %v791 = vld [vmem:[#allocation10 + $0x690] sm:$0xff]
        %v792 = vld [vmem:[#allocation10 + $0x698] sm:$0xff]
        %v793 = vld [vmem:[#allocation10 + $0x6a0] sm:$0xff]
        %v794 = vld [vmem:[#allocation10 + $0x6a8] sm:$0xff]
        %v795 = vld [vmem:[#allocation10 + $0x6b0] sm:$0xff]
        %v796 = vld [vmem:[#allocation10 + $0x6b8] sm:$0xff]
        %v797 = vld [vmem:[#allocation10 + $0x6c0] sm:$0xff]
        %v798 = vld [vmem:[#allocation10 + $0x6c8] sm:$0xff]
        %v799 = vld [vmem:[#allocation10 + $0x6d0] sm:$0xff]
        %v800 = vld [vmem:[#allocation10 + $0x6d8] sm:$0xff]
        %v801 = vld [vmem:[#allocation10 + $0x6e0] sm:$0xff]
        %v802 = vld [vmem:[#allocation10 + $0x6e8] sm:$0xff]
        %v803 = vld [vmem:[#allocation10 + $0x6f0] sm:$0xff]
        %v804 = vld [vmem:[#allocation10 + $0x6f8] sm:$0xff]
        %v805 = vld [vmem:[#allocation10 + $0x700] sm:$0xff]
        %v806 = vld [vmem:[#allocation10 + $0x708] sm:$0xff]
        %v807 = vld [vmem:[#allocation10 + $0x710] sm:$0xff]
        %v808 = vld [vmem:[#allocation10 + $0x718] sm:$0xff]
        %v809 = vld [vmem:[#allocation10 + $0x720] sm:$0xff]
        %v810 = vld [vmem:[#allocation10 + $0x728] sm:$0xff]
        %v811 = vld [vmem:[#allocation10 + $0x730] sm:$0xff]
        %v812 = vld [vmem:[#allocation10 + $0x738] sm:$0xff]
        %v813 = vld [vmem:[#allocation10 + $0x740] sm:$0xff]
        %v814 = vld [vmem:[#allocation10 + $0x748] sm:$0xff]
        %v815 = vld [vmem:[#allocation10 + $0x750] sm:$0xff]
        %v816 = vld [vmem:[#allocation10 + $0x758] sm:$0xff]
        %v817 = vld [vmem:[#allocation10 + $0x760] sm:$0xff]
        %v818 = vld [vmem:[#allocation10 + $0x768] sm:$0xff]
        %v819 = vld [vmem:[#allocation10 + $0x770] sm:$0xff]
        %v820 = vld [vmem:[#allocation10 + $0x778] sm:$0xff]
        %v821 = vld [vmem:[#allocation10 + $0x780] sm:$0xff]
        %v822 = vld [vmem:[#allocation10 + $0x788] sm:$0xff]
        %v823 = vld [vmem:[#allocation10 + $0x790] sm:$0xff]
        %v824 = vld [vmem:[#allocation10 + $0x798] sm:$0xff]
        %v825 = vld [vmem:[#allocation10 + $0x7a0] sm:$0xff]
        %v826 = vld [vmem:[#allocation10 + $0x7a8] sm:$0xff]
        %v827 = vld [vmem:[#allocation10 + $0x7b0] sm:$0xff]
        %v828 = vld [vmem:[#allocation10 + $0x7b8] sm:$0xff]
        %v829 = vld [vmem:[#allocation10 + $0x7c0] sm:$0xff]
        %v830 = vld [vmem:[#allocation10 + $0x7c8] sm:$0xff]
        %v831 = vld [vmem:[#allocation10 + $0x7d0] sm:$0xff]
        %v832 = vld [vmem:[#allocation10 + $0x7d8] sm:$0xff]
        %v833 = vld [vmem:[#allocation10 + $0x7e0] sm:$0xff]
        %v834 = vld [vmem:[#allocation10 + $0x7e8] sm:$0xff]
        %v835 = vld [vmem:[#allocation10 + $0x7f0] sm:$0xff]
        %v836 = vld [vmem:[#allocation10 + $0x7f8] sm:$0xff]
        %837 = vmatprep.subr.mxu0 %v582
        %838 = vmatpush1.msra.mxu0 %v581
        %839 = vmatprep.subr.mxu0 %v590
        %840 = vmatpush1.msra.mxu0 %v589
        %841 = vmatprep.subr.mxu0 %v598
        %842 = vmatpush1.msra.mxu0 %v597
        %843 = vmatprep.subr.mxu0 %v606
        %844 = vmatpush1.msra.mxu0 %v605
        %845 = vmatprep.subr.mxu0 %v614
        %846 = vmatpush1.msra.mxu0 %v613
        %847 = vmatprep.subr.mxu0 %v622
        %848 = vmatpush1.msra.mxu0 %v621
        %849 = vmatprep.subr.mxu0 %v630
        %850 = vmatpush1.msra.mxu0 %v629
        %851 = vmatprep.subr.mxu0 %v638
        %852 = vmatpush1.msra.mxu0 %v637
        %853 = vmatprep.subr.mxu0 %v646
        %854 = vmatpush1.msra.mxu0 %v645
        %855 = vmatprep.subr.mxu0 %v654
        %856 = vmatpush1.msra.mxu0 %v653
        %857 = vmatprep.subr.mxu0 %v662
        %858 = vmatpush1.msra.mxu0 %v661
        %859 = vmatprep.subr.mxu0 %v670
        %860 = vmatpush1.msra.mxu0 %v669
        %861 = vmatprep.subr.mxu0 %v678
        %862 = vmatpush1.msra.mxu0 %v677
        %863 = vmatprep.subr.mxu0 %v686
        %864 = vmatpush1.msra.mxu0 %v685
        %865 = vmatprep.subr.mxu0 %v694
        %866 = vmatpush1.msra.mxu0 %v693
        %867 = vmatprep.subr.mxu0 %v702
        %868 = vmatpush1.msra.mxu0 %v701
        %869 = vmatprep.subr.mxu0 %v710
        %870 = vmatpush1.msra.mxu0 %v709
        %871 = vmatprep.subr.mxu0 %v718
        %872 = vmatpush1.msra.mxu0 %v717
        %873 = vmatprep.subr.mxu0 %v726
        %874 = vmatpush1.msra.mxu0 %v725
        %875 = vmatprep.subr.mxu0 %v734
        %876 = vmatpush1.msra.mxu0 %v733
        %877 = vmatprep.subr.mxu0 %v742
        %878 = vmatpush1.msra.mxu0 %v741
        %879 = vmatprep.subr.mxu0 %v750
        %880 = vmatpush1.msra.mxu0 %v749
        %881 = vmatprep.subr.mxu0 %v758
        %882 = vmatpush1.msra.mxu0 %v757
        %883 = vmatprep.subr.mxu0 %v766
        %884 = vmatpush1.msra.mxu0 %v765
        %885 = vmatprep.subr.mxu0 %v774
        %886 = vmatpush1.msra.mxu0 %v773
        %887 = vmatprep.subr.mxu0 %v782
        %888 = vmatpush1.msra.mxu0 %v781
        %889 = vmatprep.subr.mxu0 %v790
        %890 = vmatpush1.msra.mxu0 %v789
        %891 = vmatprep.subr.mxu0 %v798
        %892 = vmatpush1.msra.mxu0 %v797
        %893 = vmatprep.subr.mxu0 %v806
        %894 = vmatpush1.msra.mxu0 %v805
        %895 = vmatprep.subr.mxu0 %v814
        %896 = vmatpush1.msra.mxu0 %v813
        %897 = vmatprep.subr.mxu0 %v822
        %898 = vmatpush1.msra.mxu0 %v821
        %899 = vmatprep.subr.mxu0 %v830
        %900 = vmatpush1.msra.mxu0 %v829
        %901 = vmatprep.mubr.f32.mxu0 %v570
        %902 = vmatmul.mubr.f32.gmra.mrb[0].mxu0 %v569
        %v903 = vpop.f32.mrb[0].mxu0
        %v904 = vadd.f32 0.0, %v903
        %v905 = vpop.f32.mrb[0].mxu0
        %v906 = vadd.f32 0.0, %v905
        %907 = vdwg.mxu0
        %908 = vmatprep.subr.mxu0 %v584
        %909 = vmatpush1.msra.mxu0 %v583
        %910 = vmatprep.subr.mxu0 %v592
        %911 = vmatpush1.msra.mxu0 %v591
        %912 = vmatprep.subr.mxu0 %v600
        %913 = vmatpush1.msra.mxu0 %v599
        %914 = vmatprep.subr.mxu0 %v608
        %915 = vmatpush1.msra.mxu0 %v607
        %916 = vmatprep.subr.mxu0 %v616
        %917 = vmatpush1.msra.mxu0 %v615
        %918 = vmatprep.subr.mxu0 %v624
        %919 = vmatpush1.msra.mxu0 %v623
        %920 = vmatprep.subr.mxu0 %v632
        %921 = vmatpush1.msra.mxu0 %v631
        %922 = vmatprep.subr.mxu0 %v640
        %923 = vmatpush1.msra.mxu0 %v639
        %924 = vmatprep.subr.mxu0 %v648
        %925 = vmatpush1.msra.mxu0 %v647
        %926 = vmatprep.subr.mxu0 %v656
        %927 = vmatpush1.msra.mxu0 %v655
        %928 = vmatprep.subr.mxu0 %v664
        %929 = vmatpush1.msra.mxu0 %v663
        %930 = vmatprep.subr.mxu0 %v672
        %931 = vmatpush1.msra.mxu0 %v671
        %932 = vmatprep.subr.mxu0 %v680
        %933 = vmatpush1.msra.mxu0 %v679
        %934 = vmatprep.subr.mxu0 %v688
        %935 = vmatpush1.msra.mxu0 %v687
        %936 = vmatprep.subr.mxu0 %v696
        %937 = vmatpush1.msra.mxu0 %v695
        %938 = vmatprep.subr.mxu0 %v704
        %939 = vmatpush1.msra.mxu0 %v703
        %940 = vmatprep.subr.mxu0 %v712
        %941 = vmatpush1.msra.mxu0 %v711
        %942 = vmatprep.subr.mxu0 %v720
        %943 = vmatpush1.msra.mxu0 %v719
        %944 = vmatprep.subr.mxu0 %v728
        %945 = vmatpush1.msra.mxu0 %v727
        %946 = vmatprep.subr.mxu0 %v736
        %947 = vmatpush1.msra.mxu0 %v735
        %948 = vmatprep.subr.mxu0 %v744
        %949 = vmatpush1.msra.mxu0 %v743
        %950 = vmatprep.subr.mxu0 %v752
        %951 = vmatpush1.msra.mxu0 %v751
        %952 = vmatprep.subr.mxu0 %v760
        %953 = vmatpush1.msra.mxu0 %v759
        %954 = vmatprep.subr.mxu0 %v768
        %955 = vmatpush1.msra.mxu0 %v767
        %956 = vmatprep.subr.mxu0 %v776
        %957 = vmatpush1.msra.mxu0 %v775
        %958 = vmatprep.subr.mxu0 %v784
        %959 = vmatpush1.msra.mxu0 %v783
        %960 = vmatprep.subr.mxu0 %v792
        %961 = vmatpush1.msra.mxu0 %v791
        %962 = vmatprep.subr.mxu0 %v800
        %963 = vmatpush1.msra.mxu0 %v799
        %964 = vmatprep.subr.mxu0 %v808
        %965 = vmatpush1.msra.mxu0 %v807
        %966 = vmatprep.subr.mxu0 %v816
        %967 = vmatpush1.msra.mxu0 %v815
        %968 = vmatprep.subr.mxu0 %v824
        %969 = vmatpush1.msra.mxu0 %v823
        %970 = vmatprep.subr.mxu0 %v832
        %971 = vmatpush1.msra.mxu0 %v831
        %972 = vmatprep.mubr.f32.mxu0 %v570
        %973 = vmatmul.mubr.f32.gmra.mrb[0].mxu0 %v569
        %v974 = vpop.f32.mrb[0].mxu0
        %v975 = vadd.f32 0.0, %v974
        %v976 = vpop.f32.mrb[0].mxu0
        %v977 = vadd.f32 0.0, %v976
        %978 = vdwg.mxu0
        %979 = vmatprep.subr.mxu0 %v586
        %980 = vmatpush1.msra.mxu0 %v585
        %981 = vmatprep.subr.mxu0 %v594
        %982 = vmatpush1.msra.mxu0 %v593
        %983 = vmatprep.subr.mxu0 %v602
        %984 = vmatpush1.msra.mxu0 %v601
        %985 = vmatprep.subr.mxu0 %v610
        %986 = vmatpush1.msra.mxu0 %v609
        %987 = vmatprep.subr.mxu0 %v618
        %988 = vmatpush1.msra.mxu0 %v617
        %989 = vmatprep.subr.mxu0 %v626
        %990 = vmatpush1.msra.mxu0 %v625
        %991 = vmatprep.subr.mxu0 %v634
        %992 = vmatpush1.msra.mxu0 %v633
        %993 = vmatprep.subr.mxu0 %v642
        %994 = vmatpush1.msra.mxu0 %v641
        %995 = vmatprep.subr.mxu0 %v650
        %996 = vmatpush1.msra.mxu0 %v649
        %997 = vmatprep.subr.mxu0 %v658
        %998 = vmatpush1.msra.mxu0 %v657
        %999 = vmatprep.subr.mxu0 %v666
        %1000 = vmatpush1.msra.mxu0 %v665
        %1001 = vmatprep.subr.mxu0 %v674
        %1002 = vmatpush1.msra.mxu0 %v673
        %1003 = vmatprep.subr.mxu0 %v682
        %1004 = vmatpush1.msra.mxu0 %v681
        %1005 = vmatprep.subr.mxu0 %v690
        %1006 = vmatpush1.msra.mxu0 %v689
        %1007 = vmatprep.subr.mxu0 %v698
        %1008 = vmatpush1.msra.mxu0 %v697
        %1009 = vmatprep.subr.mxu0 %v706
        %1010 = vmatpush1.msra.mxu0 %v705
        %1011 = vmatprep.subr.mxu0 %v714
        %1012 = vmatpush1.msra.mxu0 %v713
        %1013 = vmatprep.subr.mxu0 %v722
        %1014 = vmatpush1.msra.mxu0 %v721
        %1015 = vmatprep.subr.mxu0 %v730
        %1016 = vmatpush1.msra.mxu0 %v729
        %1017 = vmatprep.subr.mxu0 %v738
        %1018 = vmatpush1.msra.mxu0 %v737
        %1019 = vmatprep.subr.mxu0 %v746
        %1020 = vmatpush1.msra.mxu0 %v745
        %1021 = vmatprep.subr.mxu0 %v754
        %1022 = vmatpush1.msra.mxu0 %v753
        %1023 = vmatprep.subr.mxu0 %v762
        %1024 = vmatpush1.msra.mxu0 %v761
        %1025 = vmatprep.subr.mxu0 %v770
        %1026 = vmatpush1.msra.mxu0 %v769
        %1027 = vmatprep.subr.mxu0 %v778
        %1028 = vmatpush1.msra.mxu0 %v777
        %1029 = vmatprep.subr.mxu0 %v786
        %1030 = vmatpush1.msra.mxu0 %v785
        %1031 = vmatprep.subr.mxu0 %v794
        %1032 = vmatpush1.msra.mxu0 %v793
        %1033 = vmatprep.subr.mxu0 %v802
        %1034 = vmatpush1.msra.mxu0 %v801
        %1035 = vmatprep.subr.mxu0 %v810
        %1036 = vmatpush1.msra.mxu0 %v809
        %1037 = vmatprep.subr.mxu0 %v818
        %1038 = vmatpush1.msra.mxu0 %v817
        %1039 = vmatprep.subr.mxu0 %v826
        %1040 = vmatpush1.msra.mxu0 %v825
        %1041 = vmatprep.subr.mxu0 %v834
        %1042 = vmatpush1.msra.mxu0 %v833
        %1043 = vmatprep.mubr.f32.mxu0 %v570
        %1044 = vmatmul.mubr.f32.gmra.mrb[0].mxu0 %v569
        %v1045 = vpop.f32.mrb[0].mxu0
        %v1046 = vadd.f32 0.0, %v1045
        %v1047 = vpop.f32.mrb[0].mxu0
        %v1048 = vadd.f32 0.0, %v1047
        %1049 = vdwg.mxu0
        %1050 = vmatprep.subr.mxu0 %v588
        %1051 = vmatpush1.msra.mxu0 %v587
        %1052 = vmatprep.subr.mxu0 %v596
        %1053 = vmatpush1.msra.mxu0 %v595
        %1054 = vmatprep.subr.mxu0 %v604
        %1055 = vmatpush1.msra.mxu0 %v603
        %1056 = vmatprep.subr.mxu0 %v612
        %1057 = vmatpush1.msra.mxu0 %v611
        %1058 = vmatprep.subr.mxu0 %v620
        %1059 = vmatpush1.msra.mxu0 %v619
        %1060 = vmatprep.subr.mxu0 %v628
        %1061 = vmatpush1.msra.mxu0 %v627
        %1062 = vmatprep.subr.mxu0 %v636
        %1063 = vmatpush1.msra.mxu0 %v635
        %1064 = vmatprep.subr.mxu0 %v644
        %1065 = vmatpush1.msra.mxu0 %v643
        %1066 = vmatprep.subr.mxu0 %v652
        %1067 = vmatpush1.msra.mxu0 %v651
        %1068 = vmatprep.subr.mxu0 %v660
        %1069 = vmatpush1.msra.mxu0 %v659
        %1070 = vmatprep.subr.mxu0 %v668
        %1071 = vmatpush1.msra.mxu0 %v667
        %1072 = vmatprep.subr.mxu0 %v676
        %1073 = vmatpush1.msra.mxu0 %v675
        %1074 = vmatprep.subr.mxu0 %v684
        %1075 = vmatpush1.msra.mxu0 %v683
        %1076 = vmatprep.subr.mxu0 %v692
        %1077 = vmatpush1.msra.mxu0 %v691
        %1078 = vmatprep.subr.mxu0 %v700
        %1079 = vmatpush1.msra.mxu0 %v699
        %1080 = vmatprep.subr.mxu0 %v708
        %1081 = vmatpush1.msra.mxu0 %v707
        %1082 = vmatprep.subr.mxu0 %v716
        %1083 = vmatpush1.msra.mxu0 %v715
        %1084 = vmatprep.subr.mxu0 %v724
        %1085 = vmatpush1.msra.mxu0 %v723
        %1086 = vmatprep.subr.mxu0 %v732
        %1087 = vmatpush1.msra.mxu0 %v731
        %1088 = vmatprep.subr.mxu0 %v740
        %1089 = vmatpush1.msra.mxu0 %v739
        %1090 = vmatprep.subr.mxu0 %v748
        %1091 = vmatpush1.msra.mxu0 %v747
        %1092 = vmatprep.subr.mxu0 %v756
        %1093 = vmatpush1.msra.mxu0 %v755
        %1094 = vmatprep.subr.mxu0 %v764
        %1095 = vmatpush1.msra.mxu0 %v763
        %1096 = vmatprep.subr.mxu0 %v772
        %1097 = vmatpush1.msra.mxu0 %v771
        %1098 = vmatprep.subr.mxu0 %v780
        %1099 = vmatpush1.msra.mxu0 %v779
        %1100 = vmatprep.subr.mxu0 %v788
        %1101 = vmatpush1.msra.mxu0 %v787
        %1102 = vmatprep.subr.mxu0 %v796
        %1103 = vmatpush1.msra.mxu0 %v795
        %1104 = vmatprep.subr.mxu0 %v804
        %1105 = vmatpush1.msra.mxu0 %v803
        %1106 = vmatprep.subr.mxu0 %v812
        %1107 = vmatpush1.msra.mxu0 %v811
        %1108 = vmatprep.subr.mxu0 %v820
        %1109 = vmatpush1.msra.mxu0 %v819
        %1110 = vmatprep.subr.mxu0 %v828
        %1111 = vmatpush1.msra.mxu0 %v827
        %1112 = vmatprep.subr.mxu0 %v836
        %1113 = vmatpush1.msra.mxu0 %v835
        %1114 = vmatprep.mubr.f32.mxu0 %v570
        %1115 = vmatmul.mubr.f32.gmra.mrb[0].mxu0 %v569
        %v1116 = vpop.f32.mrb[0].mxu0
        %v1117 = vadd.f32 0.0, %v1116
        %v1118 = vpop.f32.mrb[0].mxu0
        %v1119 = vadd.f32 0.0, %v1118
        %1120 = vdwg.mxu0
        %v1121 = vadd.f32 %v573, %v904
        %v1122 = vadd.f32 %v574, %v906
        %v1123 = vadd.f32 %v575, %v975
        %v1124 = vadd.f32 %v576, %v977
        %v1125 = vadd.f32 %v577, %v1046
        %v1126 = vadd.f32 %v578, %v1048
        %v1127 = vadd.f32 %v579, %v1117
        %v1128 = vadd.f32 %v580, %v1119
        %v1129 = vld [vmem:[%s4] sm:$0xff]
        %v1131 = vlaneseq
        %v1132 = vshrl.u32 %v1131, 7
        %v1133 = vsub.s32 0, %v1132
        %v1134 = vrot.slane %v1129, %v1133
        %v1135 = vlaneseq
        %v1136 = vshrl.u32 %v1135, 7
        %v1137 = vsub.s32 1, %v1136
        %v1138 = vrot.slane %v1129, %v1137
        %v1139 = vlaneseq
        %v1140 = vshrl.u32 %v1139, 7
        %v1141 = vsub.s32 2, %v1140
        %v1142 = vrot.slane %v1129, %v1141
        %v1143 = vlaneseq
        %v1144 = vshrl.u32 %v1143, 7
        %v1145 = vsub.s32 3, %v1144
        %v1146 = vrot.slane %v1129, %v1145
        %v1147 = vlaneseq
        %v1148 = vshrl.u32 %v1147, 7
        %v1149 = vsub.s32 4, %v1148
        %v1150 = vrot.slane %v1129, %v1149
        %v1151 = vlaneseq
        %v1152 = vshrl.u32 %v1151, 7
        %v1153 = vsub.s32 5, %v1152
        %v1154 = vrot.slane %v1129, %v1153
        %v1155 = vlaneseq
        %v1156 = vshrl.u32 %v1155, 7
        %v1157 = vsub.s32 6, %v1156
        %v1158 = vrot.slane %v1129, %v1157
        %v1159 = vlaneseq
        %v1160 = vshrl.u32 %v1159, 7
        %v1161 = vsub.s32 7, %v1160
        %v1162 = vrot.slane %v1129, %v1161
        %v1171 = vadd.f32 %v1121, %v1134
        %v1172 = vadd.f32 %v1122, %v1138
        %v1173 = vadd.f32 %v1123, %v1142
        %v1174 = vadd.f32 %v1124, %v1146
        %v1175 = vadd.f32 %v1125, %v1150
        %v1176 = vadd.f32 %v1126, %v1154
        %v1177 = vadd.f32 %v1127, %v1158
        %v1178 = vadd.f32 %v1128, %v1162
        %v1179 = vxor.u32 %v1171, 2147483648
        %v1180 = vxor.u32 %v1172, 2147483648
        %v1181 = vmul.f32 %v1179, 1.442695
        %v1182 = vpow.pop %v1181
        %v1183 = vmul.f32 %v1180, 1.442695
        %v1184 = vpow.pop %v1183
        %v1185 = vadd.f32 %v1182, 1.0
        %v1186 = vadd.f32 %v1184, 1.0
        %v1187 = vrcp.pop %v1185
        %v1188 = vmul.f32 1.0, %v1187
        %v1189 = vrcp.pop %v1186
        %v1190 = vmul.f32 1.0, %v1189
        %v1191 = vxor.u32 %v1173, 2147483648
        %v1192 = vxor.u32 %v1174, 2147483648
        %v1193 = vmul.f32 %v1191, 1.442695
        %v1194 = vpow.pop %v1193
        %v1195 = vmul.f32 %v1192, 1.442695
        %v1196 = vpow.pop %v1195
        %v1197 = vadd.f32 %v1194, 1.0
        %v1198 = vadd.f32 %v1196, 1.0
        %v1199 = vrcp.pop %v1197
        %v1200 = vmul.f32 1.0, %v1199
        %v1201 = vrcp.pop %v1198
        %v1202 = vmul.f32 1.0, %v1201
        %v1203 = vtanh.pop %v1175
        %v1204 = vtanh.pop %v1176
        %v1205 = vxor.u32 %v1177, 2147483648
        %v1206 = vxor.u32 %v1178, 2147483648
        %v1207 = vmul.f32 %v1205, 1.442695
        %v1208 = vpow.pop %v1207
        %v1209 = vmul.f32 %v1206, 1.442695
        %v1210 = vpow.pop %v1209
        %v1211 = vadd.f32 %v1208, 1.0
        %v1212 = vadd.f32 %v1210, 1.0
        %v1213 = vrcp.pop %v1211
        %v1214 = vmul.f32 1.0, %v1213
        %v1215 = vrcp.pop %v1212
        %v1216 = vmul.f32 1.0, %v1215
        %v1217 = vmul.f32 %v571, %v1200
        %v1218 = vmul.f32 %v572, %v1202
        %v1219 = vmul.f32 %v1188, %v1203
        %v1220 = vmul.f32 %v1190, %v1204
        %v1221 = vadd.f32 %v1217, %v1219
        %v1222 = vadd.f32 %v1218, %v1220
        %v1223 = vtanh.pop %v1221
        %v1224 = vtanh.pop %v1222
        %v1225 = vmul.f32 %v1214, %v1223
        %v1226 = vmul.f32 %v1216, %v1224
        %1227 = vst [vmem:[#allocation2] sm:$0xff] %v1225
        %1228 = vst [vmem:[#allocation2 + $0x8] sm:$0xff] %v1226
        %1229 = vst [vmem:[#allocation3] sm:$0xff] %v1221
        %1230 = vst [vmem:[#allocation3 + $0x8] sm:$0xff] %v1222
        %1231 = vst [vmem:[%s548] sm:$0xff] %v1225
        %1232 = vst [vmem:[%s548 + $0x8] sm:$0xff] %v1226
        %1233 = vst [vmem:[%s555] sm:$0xff] %v1221
        %1234 = vst [vmem:[%s555 + $0x8] sm:$0xff] %v1222
        %v1235 = vpack.c.bf16 %v1225, %v1225
        %v1236 = vpack.c.bf16 %v1226, %v1226
        %v1237 = vld [vmem:[#allocation12] sm:$0xf]
        %v1238 = vld [vmem:[#allocation12 + $0x4] sm:$0xf]
        %v1239 = vld [vmem:[#allocation12 + $0x8] sm:$0xf]
        %v1240 = vld [vmem:[#allocation12 + $0xc] sm:$0xf]
        %v1241 = vld [vmem:[#allocation12 + $0x10] sm:$0xf]
        %v1242 = vld [vmem:[#allocation12 + $0x14] sm:$0xf]
        %v1243 = vld [vmem:[#allocation12 + $0x18] sm:$0xf]
        %v1244 = vld [vmem:[#allocation12 + $0x1c] sm:$0xf]
        %v1245 = vld [vmem:[#allocation12 + $0x20] sm:$0xf]
        %v1246 = vld [vmem:[#allocation12 + $0x24] sm:$0xf]
        %v1247 = vld [vmem:[#allocation12 + $0x28] sm:$0xf]
        %v1248 = vld [vmem:[#allocation12 + $0x2c] sm:$0xf]
        %v1249 = vld [vmem:[#allocation12 + $0x30] sm:$0xf]
        %v1250 = vld [vmem:[#allocation12 + $0x34] sm:$0xf]
        %v1251 = vld [vmem:[#allocation12 + $0x38] sm:$0xf]
        %v1252 = vld [vmem:[#allocation12 + $0x3c] sm:$0xf]
        %v1253 = vld [vmem:[#allocation12 + $0x40] sm:$0xf]
        %v1254 = vld [vmem:[#allocation12 + $0x44] sm:$0xf]
        %v1255 = vld [vmem:[#allocation12 + $0x48] sm:$0xf]
        %v1256 = vld [vmem:[#allocation12 + $0x4c] sm:$0xf]
        %v1257 = vld [vmem:[#allocation12 + $0x50] sm:$0xf]
        %v1258 = vld [vmem:[#allocation12 + $0x54] sm:$0xf]
        %v1259 = vld [vmem:[#allocation12 + $0x58] sm:$0xf]
        %v1260 = vld [vmem:[#allocation12 + $0x5c] sm:$0xf]
        %v1261 = vld [vmem:[#allocation12 + $0x60] sm:$0xf]
        %v1262 = vld [vmem:[#allocation12 + $0x64] sm:$0xf]
        %v1263 = vld [vmem:[#allocation12 + $0x68] sm:$0xf]
        %v1264 = vld [vmem:[#allocation12 + $0x6c] sm:$0xf]
        %v1265 = vld [vmem:[#allocation12 + $0x70] sm:$0xf]
        %v1266 = vld [vmem:[#allocation12 + $0x74] sm:$0xf]
        %v1267 = vld [vmem:[#allocation12 + $0x78] sm:$0xf]
        %v1268 = vld [vmem:[#allocation12 + $0x7c] sm:$0xf]
        %v1269 = vld [vmem:[%s6] sm:$0x1]
        %v1271 = vlaneseq
        %v1272 = vshrl.u32 %v1271, 7
        %v1273 = vsub.s32 0, %v1272
        %v1274 = vrot.slane %v1269, %v1273
        %v1308 = vunpack.c.l.b16 %v1237
        %v1309 = vunpack.c.l.b16 %v1238
        %v1310 = vunpack.c.l.b16 %v1239
        %v1311 = vunpack.c.l.b16 %v1240
        %v1312 = vunpack.c.l.b16 %v1241
        %v1313 = vunpack.c.l.b16 %v1242
        %v1314 = vunpack.c.l.b16 %v1243
        %v1315 = vunpack.c.l.b16 %v1244
        %v1316 = vunpack.c.l.b16 %v1245
        %v1317 = vunpack.c.l.b16 %v1246
        %v1318 = vunpack.c.l.b16 %v1247
        %v1319 = vunpack.c.l.b16 %v1248
        %v1320 = vunpack.c.l.b16 %v1249
        %v1321 = vunpack.c.l.b16 %v1250
        %v1322 = vunpack.c.l.b16 %v1251
        %v1323 = vunpack.c.l.b16 %v1252
        %v1324 = vunpack.c.l.b16 %v1253
        %v1325 = vunpack.c.l.b16 %v1254
        %v1326 = vunpack.c.l.b16 %v1255
        %v1327 = vunpack.c.l.b16 %v1256
        %v1328 = vunpack.c.l.b16 %v1257
        %v1329 = vunpack.c.l.b16 %v1258
        %v1330 = vunpack.c.l.b16 %v1259
        %v1331 = vunpack.c.l.b16 %v1260
        %v1332 = vunpack.c.l.b16 %v1261
        %v1333 = vunpack.c.l.b16 %v1262
        %v1334 = vunpack.c.l.b16 %v1263
        %v1335 = vunpack.c.l.b16 %v1264
        %v1336 = vunpack.c.l.b16 %v1265
        %v1337 = vunpack.c.l.b16 %v1266
        %v1338 = vunpack.c.l.b16 %v1267
        %v1339 = vunpack.c.l.b16 %v1268
        %v1340 = vpack.c.b16 %v1309, %v1308
        %v1341 = vpack.c.b16 %v1311, %v1310
        %v1342 = vpack.c.b16 %v1313, %v1312
        %v1343 = vpack.c.b16 %v1315, %v1314
        %v1344 = vpack.c.b16 %v1317, %v1316
        %v1345 = vpack.c.b16 %v1319, %v1318
        %v1346 = vpack.c.b16 %v1321, %v1320
        %v1347 = vpack.c.b16 %v1323, %v1322
        %v1348 = vpack.c.b16 %v1325, %v1324
        %v1349 = vpack.c.b16 %v1327, %v1326
        %v1350 = vpack.c.b16 %v1329, %v1328
        %v1351 = vpack.c.b16 %v1331, %v1330
        %v1352 = vpack.c.b16 %v1333, %v1332
        %v1353 = vpack.c.b16 %v1335, %v1334
        %v1354 = vpack.c.b16 %v1337, %v1336
        %v1355 = vpack.c.b16 %v1339, %v1338
        %1372 = vmatprep.subr.bf16.mxu0 0
        %1373 = vmatpush1.bf16.msra.mxu0 %v1340
        %1374 = vmatprep.subr.bf16.mxu0 0
        %1375 = vmatpush1.bf16.msra.mxu0 %v1341
        %1376 = vmatprep.subr.bf16.mxu0 0
        %1377 = vmatpush1.bf16.msra.mxu0 %v1342
        %1378 = vmatprep.subr.bf16.mxu0 0
        %1379 = vmatpush1.bf16.msra.mxu0 %v1343
        %1380 = vmatprep.subr.bf16.mxu0 0
        %1381 = vmatpush1.bf16.msra.mxu0 %v1344
        %1382 = vmatprep.subr.bf16.mxu0 0
        %1383 = vmatpush1.bf16.msra.mxu0 %v1345
        %1384 = vmatprep.subr.bf16.mxu0 0
        %1385 = vmatpush1.bf16.msra.mxu0 %v1346
        %1386 = vmatprep.subr.bf16.mxu0 0
        %1387 = vmatpush1.bf16.msra.mxu0 %v1347
        %1388 = vmatprep.subr.bf16.mxu0 0
        %1389 = vmatpush1.bf16.msra.mxu0 %v1348
        %1390 = vmatprep.subr.bf16.mxu0 0
        %1391 = vmatpush1.bf16.msra.mxu0 %v1349
        %1392 = vmatprep.subr.bf16.mxu0 0
        %1393 = vmatpush1.bf16.msra.mxu0 %v1350
        %1394 = vmatprep.subr.bf16.mxu0 0
        %1395 = vmatpush1.bf16.msra.mxu0 %v1351
        %1396 = vmatprep.subr.bf16.mxu0 0
        %1397 = vmatpush1.bf16.msra.mxu0 %v1352
        %1398 = vmatprep.subr.bf16.mxu0 0
        %1399 = vmatpush1.bf16.msra.mxu0 %v1353
        %1400 = vmatprep.subr.bf16.mxu0 0
        %1401 = vmatpush1.bf16.msra.mxu0 %v1354
        %1402 = vmatprep.subr.bf16.mxu0 0
        %1403 = vmatpush1.bf16.msra.mxu0 %v1355
        %1404 = vmatprep.mubr.bf16.mxu0 %v1236
        %1405 = vmatmul.mubr.bf16.gmra.mrb[0].mxu0 %v1235
        %v1406 = vpop.f32.mrb[0].mxu0
        %v1407 = vadd.f32 %v1274, %v1406
        %v1408 = vpop.f32.mrb[0].mxu0
        %v1409 = vpop.f32.mrb[0].mxu0
        %v1410 = vpop.f32.mrb[0].mxu0
        %1411 = vdwg.mxu0
        %v1412 = vmax.f32 %v1407, 0.0
        %v1413 = vpack.c.bf16 %v1412, %v1412
        %v1414 = vld [vmem:[#allocation13] sm:$0xf]
        %v1415 = vld [vmem:[#allocation13 + $0x4] sm:$0xf]
        %v1416 = vld [vmem:[#allocation13 + $0x8] sm:$0xf]
        %v1417 = vld [vmem:[#allocation13 + $0xc] sm:$0xf]
        %v1418 = vld [vmem:[#allocation13 + $0x10] sm:$0xf]
        %v1419 = vld [vmem:[#allocation13 + $0x14] sm:$0xf]
        %v1420 = vld [vmem:[#allocation13 + $0x18] sm:$0xf]
        %v1421 = vld [vmem:[#allocation13 + $0x1c] sm:$0xf]
        %v1422 = vld [vmem:[#allocation13 + $0x20] sm:$0xf]
        %v1423 = vld [vmem:[#allocation13 + $0x24] sm:$0xf]
        %v1424 = vld [vmem:[#allocation13 + $0x28] sm:$0xf]
        %v1425 = vld [vmem:[#allocation13 + $0x2c] sm:$0xf]
        %v1426 = vld [vmem:[#allocation13 + $0x30] sm:$0xf]
        %v1427 = vld [vmem:[#allocation13 + $0x34] sm:$0xf]
        %v1428 = vld [vmem:[#allocation13 + $0x38] sm:$0xf]
        %v1429 = vld [vmem:[#allocation13 + $0x3c] sm:$0xf]
        %v1430 = vld [vmem:[%s8] sm:$0x1]
        %v1432 = vlaneseq
        %v1433 = vshrl.u32 %v1432, 7
        %v1434 = vsub.s32 0, %v1433
        %v1435 = vrot.slane %v1430, %v1434
        %v1453 = vunpack.c.l.b16 %v1414
        %v1454 = vunpack.c.l.b16 %v1415
        %v1455 = vunpack.c.l.b16 %v1416
        %v1456 = vunpack.c.l.b16 %v1417
        %v1457 = vunpack.c.l.b16 %v1418
        %v1458 = vunpack.c.l.b16 %v1419
        %v1459 = vunpack.c.l.b16 %v1420
        %v1460 = vunpack.c.l.b16 %v1421
        %v1461 = vunpack.c.l.b16 %v1422
        %v1462 = vunpack.c.l.b16 %v1423
        %v1463 = vunpack.c.l.b16 %v1424
        %v1464 = vunpack.c.l.b16 %v1425
        %v1465 = vunpack.c.l.b16 %v1426
        %v1466 = vunpack.c.l.b16 %v1427
        %v1467 = vunpack.c.l.b16 %v1428
        %v1468 = vunpack.c.l.b16 %v1429
        %v1469 = vpack.c.b16 %v1454, %v1453
        %v1470 = vpack.c.b16 %v1456, %v1455
        %v1471 = vpack.c.b16 %v1458, %v1457
        %v1472 = vpack.c.b16 %v1460, %v1459
        %v1473 = vpack.c.b16 %v1462, %v1461
        %v1474 = vpack.c.b16 %v1464, %v1463
        %v1475 = vpack.c.b16 %v1466, %v1465
        %v1476 = vpack.c.b16 %v1468, %v1467
        %1485 = vmatprep.subr.bf16.mxu0 0
        %1486 = vmatpush1.bf16.msra.mxu0 %v1469
        %1487 = vmatprep.subr.bf16.mxu0 0
        %1488 = vmatpush1.bf16.msra.mxu0 %v1470
        %1489 = vmatprep.subr.bf16.mxu0 0
        %1490 = vmatpush1.bf16.msra.mxu0 %v1471
        %1491 = vmatprep.subr.bf16.mxu0 0
        %1492 = vmatpush1.bf16.msra.mxu0 %v1472
        %1493 = vmatprep.subr.bf16.mxu0 0
        %1494 = vmatpush1.bf16.msra.mxu0 %v1473
        %1495 = vmatprep.subr.bf16.mxu0 0
        %1496 = vmatpush1.bf16.msra.mxu0 %v1474
        %1497 = vmatprep.subr.bf16.mxu0 0
        %1498 = vmatpush1.bf16.msra.mxu0 %v1475
        %1499 = vmatprep.subr.bf16.mxu0 0
        %1500 = vmatpush1.bf16.msra.mxu0 %v1476
        %1501 = vmatprep.subr.bf16.mxu0 0
        %1502 = vmatpush1.bf16.msra.mxu0 0
        %1503 = vmatprep.subr.bf16.mxu0 0
        %1504 = vmatpush1.bf16.msra.mxu0 0
        %1505 = vmatprep.subr.bf16.mxu0 0
        %1506 = vmatpush1.bf16.msra.mxu0 0
        %1507 = vmatprep.subr.bf16.mxu0 0
        %1508 = vmatpush1.bf16.msra.mxu0 0
        %1509 = vmatprep.subr.bf16.mxu0 0
        %1510 = vmatpush1.bf16.msra.mxu0 0
        %1511 = vmatprep.subr.bf16.mxu0 0
        %1512 = vmatpush1.bf16.msra.mxu0 0
        %1513 = vmatprep.subr.bf16.mxu0 0
        %1514 = vmatpush1.bf16.msra.mxu0 0
        %1515 = vmatprep.subr.bf16.mxu0 0
        %1516 = vmatpush1.bf16.msra.mxu0 0
        %1517 = vmatprep.mubr.bf16.mxu0 0
        %1518 = vmatmul.mubr.bf16.gmra.mrb[0].mxu0 %v1413
        %v1519 = vpop.f32.mrb[0].mxu0
        %v1520 = vadd.f32 %v1435, %v1519
        %v1521 = vpop.f32.mrb[0].mxu0
        %v1522 = vpop.f32.mrb[0].mxu0
        %v1523 = vpop.f32.mrb[0].mxu0
        %1524 = vdwg.mxu0
        %1525 = vst [vmem:[%s541] sm:$0xff] %v1520
        %s1526 = sand.u32 %s265, 1
        %s1527 = scalar_lea.sflag [#allocation6], %s1526
        %s1528 = sand.u32 %s265, 1
        %s1529 = smul.addr %s1528, 8
        %s1530 = scalar_lea.vmem [#allocation15], %s1529
        %s1531 = sand.u32 %s37, 1
        %s1532 = scalar_lea.sflag [#allocation17], %s1531
        %s1533 = sand.u32 %s291, 1
        %s1534 = smul.addr %s1533, 16
        %s1535 = scalar_lea.vmem [#allocation16], %s1534
        %s1536 = sand.u32 %s37, 1
        %s1537 = scalar_lea.sflag [#allocation17], %s1536
        %s1538 = sand.u32 %s317, 1
        %s1539 = smul.addr %s1538, 16
        %s1540 = scalar_lea.vmem [#allocation18], %s1539
        // Predicated region
        $region85: #{tpu_custom_call.1} parent=55 // pred_check
          %p1541 = pneg %p275
        $region86: #{tpu_custom_call.1} parent=55 // pred_check_branch
          %1543 = sbr.rel (%p1541) target = $region88
        $region87: #{tpu_custom_call.1} parent=55 // pred_region
          %s1545 = ssub.s32 128, 128
          %1546 = vsyncadd %s1527, %s1545
          %s1547 = smul.addr %s42, 2
          %s1548 = sadd.s32 %s41, %s1547
          %s1549 = smul.addr %s1548, 128
          %s1550 = scalar_lea.hbm %s9, %s1549
          %s1552 = sshll.u32 %s1530, 4
          %s1553 = int_to_ptr.vmem [resolvable:$true] %s1552
          %1555 = dma.vmem_to_hbm [thread:$0]  %s1553, 128, %s1550, %s1527
        $region88: #{tpu_custom_call.1} parent=55 // pred_fallthru
          _
        // Predicated region
        $region89: #{tpu_custom_call.1} parent=55 // pred_check
          %p1556 = pneg %p301
        $region90: #{tpu_custom_call.1} parent=55 // pred_check_branch
          %1558 = sbr.rel (%p1556) target = $region92
        $region91: #{tpu_custom_call.1} parent=55 // pred_region
          %s1560 = ssub.s32 256, 256
          %1561 = vsyncadd %s1532, %s1560
          %s1562 = smul.addr %s41, 2
          %s1563 = smul.addr %s1562, 128
          %s1564 = scalar_lea.hbm %s10, %s1563
          %s1566 = sshll.u32 %s1535, 4
          %s1567 = int_to_ptr.vmem [resolvable:$true] %s1566
          %1569 = dma.vmem_to_hbm [thread:$0]  %s1567, 256, %s1564, %s1532
        $region92: #{tpu_custom_call.1} parent=55 // pred_fallthru
          _
        // Predicated region
        $region93: #{tpu_custom_call.1} parent=55 // pred_check
          %p1570 = pneg %p327
        $region94: #{tpu_custom_call.1} parent=55 // pred_check_branch
          %1572 = sbr.rel (%p1570) target = $region96
        $region95: #{tpu_custom_call.1} parent=55 // pred_region
          %s1574 = ssub.s32 256, 256
          %1575 = vsyncadd %s1537, %s1574
          %s1576 = smul.addr %s41, 2
          %s1577 = smul.addr %s1576, 128
          %s1578 = scalar_lea.hbm %s11, %s1577
          %s1580 = sshll.u32 %s1540, 4
          %s1581 = int_to_ptr.vmem [resolvable:$true] %s1580
          %1583 = dma.vmem_to_hbm [thread:$0]  %s1581, 256, %s1578, %s1537
        $region96: #{tpu_custom_call.1} parent=55 // pred_fallthru
          _
      $region56: #{tpu_custom_call.1} parent=5 // pred_fallthru
        _
      %p1584 = scmp.le.s32.totalorder 2, %s32
      // Predicated region
      $region97: #{tpu_custom_call.1} parent=5 // pred_check
        %p1585 = pneg %p1584
      $region98: #{tpu_custom_call.1} parent=5 // pred_check_branch
        %1587 = sbr.rel (%p1585) target = $region100
      $region99: #{tpu_custom_call.1} parent=5 // pred_region
        %s1588 = ssub.s32 %s32, 2
        // Predicated region
        $region101: #{tpu_custom_call.1} parent=99 // pred_check
          %p1589 = pneg %p281
        $region102: #{tpu_custom_call.1} parent=99 // pred_check_branch
          %1591 = sbr.rel (%p1589) target = $region104
        $region103: #{tpu_custom_call.1} parent=99 // pred_region
          %s1592 = sand.u32 %s266, 1
          %s1593 = scalar_lea.sflag [#allocation6], %s1592
          %s1594 = sand.u32 %s266, 1
          %s1595 = smul.addr %s1594, 8
          %s1596 = scalar_lea.vmem [#allocation15], %s1595
          %1597 = dma.done %s1593, 128
        $region104: #{tpu_custom_call.1} parent=99 // pred_fallthru
          _
        // Predicated region
        $region105: #{tpu_custom_call.1} parent=99 // pred_check
          %p1598 = pneg %p307
        $region106: #{tpu_custom_call.1} parent=99 // pred_check_branch
          %1600 = sbr.rel (%p1598) target = $region108
        $region107: #{tpu_custom_call.1} parent=99 // pred_region
          %s1601 = sand.u32 %s38, 1
          %s1602 = scalar_lea.sflag [#allocation17], %s1601
          %s1603 = sand.u32 %s292, 1
          %s1604 = smul.addr %s1603, 16
          %s1605 = scalar_lea.vmem [#allocation16], %s1604
          %1606 = dma.done %s1602, 256
        $region108: #{tpu_custom_call.1} parent=99 // pred_fallthru
          _
        // Predicated region
        $region109: #{tpu_custom_call.1} parent=99 // pred_check
          %p1607 = pneg %p333
        $region110: #{tpu_custom_call.1} parent=99 // pred_check_branch
          %1609 = sbr.rel (%p1607) target = $region112
        $region111: #{tpu_custom_call.1} parent=99 // pred_region
          %s1610 = sand.u32 %s38, 1
          %s1611 = scalar_lea.sflag [#allocation17], %s1610
          %s1612 = sand.u32 %s318, 1
          %s1613 = smul.addr %s1612, 16
          %s1614 = scalar_lea.vmem [#allocation18], %s1613
          %1615 = dma.done %s1611, 256
        $region112: #{tpu_custom_call.1} parent=99 // pred_fallthru
          _
      $region100: #{tpu_custom_call.1} parent=5 // pred_fallthru
        _
    $region6: #{tpu_custom_call.1} parent=1 // loop_footer
      %s36 = sadd.s32 1, %s32
    $region7: #{tpu_custom_call.1} parent=1 // loop_footer_branch
      %31 = sbr.rel target = $region3
    $region8: #{tpu_custom_call.1} parent=1 // loop_exit
      _
    %1616 = vsyncpa [#allocation5], 1
    %s1617 = scalar_lea.sflag [#allocation5], 1
    %1618 = vsyncpa %s1617, 1
    %1619 = vsyncpa [#allocation8], 1
    %s1620 = scalar_lea.sflag [#allocation8], 1
    %1621 = vsyncpa %s1620, 1
    %1622 = vsyncpa [#allocation11], 1
    %1623 = vsyncpa [#allocation14], 1
    %1624 = vsyncpa [#allocation6], 1
    %s1625 = scalar_lea.sflag [#allocation6], 1
    %1626 = vsyncpa %s1625, 1
    %1627 = vsyncpa [#allocation17], 1
    %s1628 = scalar_lea.sflag [#allocation17], 1
    %1629 = vsyncpa %s1628, 1

</llo_original>
